<compile_context>
chip_gen: v6e
topology: v6e:2x2x1
jax: 0.10.0
libtpu: 0.0.40
codegen_flags: <defaults>
</compile_context>

<pallas_src>
import numpy as np
import jax
import jax.numpy as jnp
from jax import lax
from jax.experimental import pallas as pl
from jax.experimental.pallas import tpu as pltpu

# --- model hyperparameters (CNN defaults) ---
B = 2             # batch
IN_C = 1          # input_channel
MID_C = 4         # internal_channel
NUM_CLASSES = 2   # output_channel
K = 8             # conv_kernel_size
STRIDE = 1
PAD = 2
IN_DIM = 28
POOL = 2
HIDDEN = 128

C1_CONV = (IN_DIM - K + 2 * PAD) // STRIDE + 1      # 25
C1_POOL = (C1_CONV - POOL) // POOL + 1              # 12 (floor-mode pool)
C2_CONV = (C1_POOL + 2 * PAD - K) // STRIDE + 1     # 9
C2_POOL = (C2_CONV - POOL) // POOL + 1              # 4
FLAT = MID_C * C2_POOL * C2_POOL                    # 64
XPADDIM = IN_DIM + 2 * PAD                          # 32

# --- in-kernel row layout ---------------------------------------------------
RS = 40        # per-batch row stride on the sublane axis
OFF = 4        # first valid conv1 output row within a batch block
XROWS = 80     # rows of the flat, zero-padded conv1 input buffer
R1 = 72        # conv1 accumulator rows (covers every row conv2 reads)
R2 = 56        # conv2 accumulator rows
LANE_HALF = 64 # even / odd conv output columns live in lanes [0,64) / [64,128)


def _out_lane(o, w):
    # conv output column w of channel o -> lane. Even/odd w go to separate 64-lane halves so
    # the 2x2 width-pool is a single max of two contiguous lane blocks.
    return (w % 2) * LANE_HALF + o * 16 + (w // 2)


# ---------------- host-side weight / input repack (block-Toeplitz form) ----------------

def _conv1_toeplitz(w1):
    # (K*32, 128): row = ky*32 + padded-input col j ; col = _out_lane(o, w); entry = w1[o,0,ky,j-w]
    idx = np.zeros((K * XPADDIM, 128), np.int32)
    val = np.zeros((K * XPADDIM, 128), np.float32)
    for ky in range(K):
        for o in range(MID_C):
            for w in range(C1_CONV):
                for kx in range(K):
                    r = ky * XPADDIM + (w + kx)
                    c = _out_lane(o, w)
                    idx[r, c] = (o * K + ky) * K + kx        # flat index into w1 (MID_C,1,K,K)
                    val[r, c] = 1.0
    return jnp.asarray(val) * w1.reshape(-1)[jnp.asarray(idx)]


def _conv2_toeplitz(w2):
    # (K, 64, 128): row = ci*16 + pooled-1 col j ; col = _out_lane(o, w2); entry = w2[o,ci,ky,j+PAD-w2]
    # Width zero-padding of conv2 is folded in (only j=0..11 rows are populated).
    idx = np.zeros((K, MID_C * 16, 128), np.int32)
    val = np.zeros((K, MID_C * 16, 128), np.float32)
    for ky in range(K):
        for ci in range(MID_C):
            for j in range(C1_POOL):
                for o in range(MID_C):
                    for w in range(C2_CONV):
                        kx = j + PAD - w
                        if 0 <= kx < K:
                            r = ci * 16 + j
                            c = _out_lane(o, w)
                            idx[ky, r, c] = ((o * MID_C + ci) * K + ky) * K + kx
                            val[ky, r, c] = 1.0
    return jnp.asarray(val) * w2.reshape(-1)[jnp.asarray(idx)]


def _bias_row(b_vec, n_cols):
    oidx = np.zeros(128, np.int32)
    val = np.zeros(128, np.float32)
    for o in range(MID_C):
        for w in range(n_cols):
            oidx[_out_lane(o, w)] = o
            val[_out_lane(o, w)] = 1.0
    return (b_vec[jnp.asarray(oidx)] * jnp.asarray(val)).reshape(1, 128)


def _pool1_row_mask():
    # 1.0 only on pooled-1 rows (b*RS + OFF + 2*i); every other row is zeroed, which also
    # supplies conv2's zero row-padding (the folded Toeplitz reads those rows as padding).
    m = np.zeros((R1 - 1, LANE_HALF), np.float32)
    for b in range(B):
        for i in range(C1_POOL):
            m[b * RS + OFF + 2 * i, :] = 1.0
    return jnp.asarray(m)


def _fused_fc(params):
    # ff_2(ff_1(x)) with no activation and eval-mode dropout between them => exact fusion.
    # NOTE: must be reverted if training-mode dropout is added between the FC layers.
    wc = jnp.matmul(params['wf1'].T, params['wf2'].T, precision=lax.Precision.HIGHEST)  # (FLAT, 2)
    bc = jnp.matmul(params['bf1'], params['wf2'].T, precision=lax.Precision.HIGHEST) + params['bf2']
    # expand to the kernel flatten layout: feat lane = h*64 + o*16 + w  ->  torch flat o*16 + h*4 + w
    idx = np.zeros(C2_POOL * LANE_HALF, np.int32)
    val = np.zeros(C2_POOL * LANE_HALF, np.float32)
    for h in range(C2_POOL):
        for o in range(MID_C):
            for w in range(C2_POOL):
                r = h * LANE_HALF + o * 16 + w
                idx[r] = o * C2_POOL * C2_POOL + h * C2_POOL + w
                val[r] = 1.0
    wc_big = wc[jnp.asarray(idx), :] * jnp.asarray(val)[:, None]       # (256, NUM_CLASSES)
    return wc_big, bc.reshape(1, NUM_CLASSES)


def _im2col_conv1(x_nchw):
    img = jnp.pad(x_nchw.astype(jnp.float32)[:, 0], ((0, 0), (PAD, PAD), (PAD, PAD)))  # (B,32,32)
    xf = jnp.zeros((XROWS, XPADDIM), jnp.float32)
    for b in range(B):
        xf = xf.at[b * RS + OFF: b * RS + OFF + XPADDIM, :].set(img[b])
    # im2col along lanes: column block ky holds input rows r+ky  -> (R1, K*32)
    return jnp.concatenate([xf[ky: ky + R1, :] for ky in range(K)], axis=1)


# ---------------- the kernel ----------------

def _cnn_kernel(xcol_ref, t1_ref, b1_ref, mask_ref, t2_ref, b2_ref, wc_ref, bc_ref, out_ref):
    f32 = jnp.float32
    H = LANE_HALF

    # conv block 1: one im2col x block-Toeplitz MXU matmul + bias + ReLU
    a1 = jnp.dot(xcol_ref[...], t1_ref[...], preferred_element_type=f32)     # (R1, 128)
    a1 = jnp.maximum(a1 + b1_ref[...], 0.0)
    # 2x2 maxpool: width = max of the two contiguous lane halves; height = max of adjacent rows
    # (pooled rows stay at sublane stride 2 — no compaction needed).
    hl = jnp.maximum(a1[:, :H], a1[:, H:])                                   # (R1, 64)
    hp = jnp.maximum(hl[:R1 - 1, :], hl[1:, :])                              # (R1-1, 64)
    hp = hp * mask_ref[...]      # keep only pooled rows; doubles as conv2's zero row-padding

    # conv block 2: 8 per-ky block-Toeplitz matmuls, f32 accumulation
    # TODO(synk): on v7x these partials could accumulate in-place in the MRB; not expressible
    # from jnp — the dot+add chain is left to Mosaic's scheduler.
    a2 = jnp.dot(hp[0:R2, :], t2_ref[0], preferred_element_type=f32)         # (R2, 128)
    for ky in range(1, K):
        a2 = a2 + jnp.dot(hp[2 * ky: 2 * ky + R2, :], t2_ref[ky],
                          preferred_element_type=f32)
    a2 = jnp.maximum(a2 + b2_ref[...], 0.0)
    h2l = jnp.maximum(a2[:, :H], a2[:, H:])                                  # (R2, 64)
    h2 = jnp.maximum(h2l[:R2 - 2, :], h2l[2:, :])                            # (R2-2, 64)

    # flatten (4 pooled rows per batch -> one 256-lane row) + fused ff_1/ff_2 + LogSoftmax.
    # dropout_1 / dropout_2 are identity at inference.
    # TODO(synk): training-mode dropout (p=0.2) is not implemented in the kernel.
    feat = jnp.concatenate(
        [jnp.concatenate([h2[b * RS + 2 * POOL * m: b * RS + 2 * POOL * m + 1, :]
                          for m in range(C2_POOL)], axis=1)
         for b in range(B)], axis=0)                                         # (B, 256)
    logits = jnp.dot(feat, wc_ref[...], preferred_element_type=f32) + bc_ref[...]
    mx = jnp.max(logits, axis=-1, keepdims=True)
    s = logits - mx
    out_ref[...] = s - jnp.log(jnp.sum(jnp.exp(s), axis=-1, keepdims=True))


# ---------------- wrapper / params / reference ----------------

def init_params(key):
    # matches CNN._initialize_weights(mean=0, std=0.05): normal weights, zero biases
    std = 0.05
    ks = jax.random.split(key, 4)
    return dict(
        w1=std * jax.random.normal(ks[0], (MID_C, IN_C, K, K), jnp.float32),
        b1=jnp.zeros((MID_C,), jnp.float32),
        w2=std * jax.random.normal(ks[1], (MID_C, MID_C, K, K), jnp.float32),
        b2=jnp.zeros((MID_C,), jnp.float32),
        wf1=std * jax.random.normal(ks[2], (HIDDEN, FLAT), jnp.float32),
        bf1=jnp.zeros((HIDDEN,), jnp.float32),
        wf2=std * jax.random.normal(ks[3], (NUM_CLASSES, HIDDEN), jnp.float32),
        bf2=jnp.zeros((NUM_CLASSES,), jnp.float32),
    )


def cnn_forward_pallas(x_nchw, params):
    xcol = _im2col_conv1(x_nchw)
    t1 = _conv1_toeplitz(params['w1'])
    b1row = _bias_row(params['b1'], C1_CONV)
    mask = _pool1_row_mask()
    t2 = _conv2_toeplitz(params['w2'])
    b2row = _bias_row(params['b2'], C2_CONV)
    wc_big, bc = _fused_fc(params)

    vmem = pl.BlockSpec(memory_space=pltpu.MemorySpace.VMEM)
    logp = pl.pallas_call(
        _cnn_kernel,
        out_shape=jax.ShapeDtypeStruct((B, NUM_CLASSES), jnp.float32),
        in_specs=[vmem] * 8,
        out_specs=vmem,
    )(xcol, t1, b1row, mask, t2, b2row, wc_big, bc)
    return logp, None                                   # (x, loss) with y=None


def cnn_forward_reference(x_nchw, params):
    # pure-JAX reference of the PyTorch forward (eval mode)
    def conv_block(x, w, b):
        y = lax.conv_general_dilated(
            x, w, window_strides=(STRIDE, STRIDE), padding=((PAD, PAD), (PAD, PAD)),
            dimension_numbers=('NCHW', 'OIHW', 'NCHW'), precision=lax.Precision.HIGHEST)
        y = jnp.maximum(y + b[None, :, None, None], 0.0)
        y = lax.reduce_window(y, -jnp.inf, lax.max,
                              window_dimensions=(1, 1, POOL, POOL),
                              window_strides=(1, 1, POOL, POOL), padding='VALID')
        return y

    h = conv_block(x_nchw.astype(jnp.float32), params['w1'], params['b1'])
    h = conv_block(h, params['w2'], params['b2'])
    h = h.reshape(h.shape[0], -1)
    h = jnp.matmul(h, params['wf1'].T, precision=lax.Precision.HIGHEST) + params['bf1']
    h = jnp.matmul(h, params['wf2'].T, precision=lax.Precision.HIGHEST) + params['bf2']
    return jax.nn.log_softmax(h, axis=-1)


if __name__ == "__main__":
    key = jax.random.PRNGKey(0)
    pkey, xkey = jax.random.split(key)
    params = init_params(pkey)
    x = jax.random.normal(xkey, (B, IN_C, IN_DIM, IN_DIM), jnp.float32)

    logp, loss = cnn_forward_pallas(x, params)
    logp = jax.block_until_ready(logp)

    ref = jax.block_until_ready(cnn_forward_reference(x, params))
    if not np.allclose(np.asarray(logp), np.asarray(ref), atol=5e-3, rtol=5e-3):
        raise AssertionError("Pallas CNN output does not match JAX reference")

    print("KERNEL_OK")
</pallas_src>

<mosaic_0001>
module attributes {stable_mosaic.version = 11 : i64} {
  func.func @_cnn_kernel(%arg0: memref<72x256xf32, #tpu.memory_space<vmem>>, %arg1: memref<256x128xf32, #tpu.memory_space<vmem>>, %arg2: memref<1x128xf32, #tpu.memory_space<vmem>>, %arg3: memref<71x64xf32, #tpu.memory_space<vmem>>, %arg4: memref<8x64x128xf32, #tpu.memory_space<vmem>>, %arg5: memref<1x128xf32, #tpu.memory_space<vmem>>, %arg6: memref<256x2xf32, #tpu.memory_space<vmem>>, %arg7: memref<1x2xf32, #tpu.memory_space<vmem>>, %arg8: memref<2x2xf32, #tpu.memory_space<vmem>>) attributes {dimension_semantics = [], scalar_prefetch = 0 : i64, scratch_operands = 0 : i64, tpu.core_type = #tpu.core_type<tc>} {
    %c0 = arith.constant 0 : index
    %c0_0 = arith.constant 0 : index
    %0 = vector.load %arg0[%c0, %c0_0] : memref<72x256xf32, #tpu.memory_space<vmem>>, vector<72x256xf32>
    %c0_1 = arith.constant 0 : index
    %c0_2 = arith.constant 0 : index
    %1 = vector.load %arg1[%c0_1, %c0_2] : memref<256x128xf32, #tpu.memory_space<vmem>>, vector<256x128xf32>
    %cst = arith.constant dense<0.000000e+00> : vector<72x128xf32>
    %2 = tpu.matmul %0, %1, %cst {dimension_numbers = #tpu.dot_dimension_numbers<[1], [0], [0], [1], [0, 0, 1, 1], [], []>} : vector<72x256xf32>, vector<256x128xf32>, vector<72x128xf32> -> vector<72x128xf32>
    %c0_3 = arith.constant 0 : index
    %c0_4 = arith.constant 0 : index
    %3 = vector.load %arg2[%c0_3, %c0_4] : memref<1x128xf32, #tpu.memory_space<vmem>>, vector<1x128xf32>
    %4 = vector.broadcast %3 : vector<1x128xf32> to vector<72x128xf32>
    %5 = arith.addf %2, %4 : vector<72x128xf32>
    %cst_5 = arith.constant 0.000000e+00 : f32
    %6 = vector.broadcast %cst_5 : f32 to vector<72x128xf32>
    %7 = arith.maximumf %5, %6 : vector<72x128xf32>
    %8 = vector.extract_strided_slice %7 {offsets = [0, 0], sizes = [72, 64], strides = [1, 1]} : vector<72x128xf32> to vector<72x64xf32>
    %9 = vector.extract_strided_slice %7 {offsets = [0, 64], sizes = [72, 64], strides = [1, 1]} : vector<72x128xf32> to vector<72x64xf32>
    %10 = arith.maximumf %8, %9 : vector<72x64xf32>
    %11 = vector.extract_strided_slice %10 {offsets = [0, 0], sizes = [71, 64], strides = [1, 1]} : vector<72x64xf32> to vector<71x64xf32>
    %12 = vector.extract_strided_slice %10 {offsets = [1, 0], sizes = [71, 64], strides = [1, 1]} : vector<72x64xf32> to vector<71x64xf32>
    %13 = arith.maximumf %11, %12 : vector<71x64xf32>
    %c0_6 = arith.constant 0 : index
    %c0_7 = arith.constant 0 : index
    %14 = vector.load %arg3[%c0_6, %c0_7] : memref<71x64xf32, #tpu.memory_space<vmem>>, vector<71x64xf32>
    %15 = arith.mulf %13, %14 : vector<71x64xf32>
    %16 = vector.extract_strided_slice %15 {offsets = [0, 0], sizes = [56, 64], strides = [1, 1]} : vector<71x64xf32> to vector<56x64xf32>
    %c0_8 = arith.constant 0 : index
    %c0_9 = arith.constant 0 : index
    %c0_10 = arith.constant 0 : index
    %17 = vector.load %arg4[%c0_8, %c0_9, %c0_10] : memref<8x64x128xf32, #tpu.memory_space<vmem>>, vector<1x64x128xf32>
    %18 = vector.shape_cast %17 : vector<1x64x128xf32> to vector<64x128xf32>
    %cst_11 = arith.constant dense<0.000000e+00> : vector<56x128xf32>
    %19 = tpu.matmul %16, %18, %cst_11 {dimension_numbers = #tpu.dot_dimension_numbers<[1], [0], [0], [1], [0, 0, 1, 1], [], []>} : vector<56x64xf32>, vector<64x128xf32>, vector<56x128xf32> -> vector<56x128xf32>
    %20 = vector.extract_strided_slice %15 {offsets = [2, 0], sizes = [56, 64], strides = [1, 1]} : vector<71x64xf32> to vector<56x64xf32>
    %c1 = arith.constant 1 : index
    %c0_12 = arith.constant 0 : index
    %c0_13 = arith.constant 0 : index
    %21 = vector.load %arg4[%c1, %c0_12, %c0_13] : memref<8x64x128xf32, #tpu.memory_space<vmem>>, vector<1x64x128xf32>
    %22 = vector.shape_cast %21 : vector<1x64x128xf32> to vector<64x128xf32>
    %cst_14 = arith.constant dense<0.000000e+00> : vector<56x128xf32>
    %23 = tpu.matmul %20, %22, %cst_14 {dimension_numbers = #tpu.dot_dimension_numbers<[1], [0], [0], [1], [0, 0, 1, 1], [], []>} : vector<56x64xf32>, vector<64x128xf32>, vector<56x128xf32> -> vector<56x128xf32>
    %24 = arith.addf %19, %23 : vector<56x128xf32>
    %25 = vector.extract_strided_slice %15 {offsets = [4, 0], sizes = [56, 64], strides = [1, 1]} : vector<71x64xf32> to vector<56x64xf32>
    %c2 = arith.constant 2 : index
    %c0_15 = arith.constant 0 : index
    %c0_16 = arith.constant 0 : index
    %26 = vector.load %arg4[%c2, %c0_15, %c0_16] : memref<8x64x128xf32, #tpu.memory_space<vmem>>, vector<1x64x128xf32>
    %27 = vector.shape_cast %26 : vector<1x64x128xf32> to vector<64x128xf32>
    %cst_17 = arith.constant dense<0.000000e+00> : vector<56x128xf32>
    %28 = tpu.matmul %25, %27, %cst_17 {dimension_numbers = #tpu.dot_dimension_numbers<[1], [0], [0], [1], [0, 0, 1, 1], [], []>} : vector<56x64xf32>, vector<64x128xf32>, vector<56x128xf32> -> vector<56x128xf32>
    %29 = arith.addf %24, %28 : vector<56x128xf32>
    %30 = vector.extract_strided_slice %15 {offsets = [6, 0], sizes = [56, 64], strides = [1, 1]} : vector<71x64xf32> to vector<56x64xf32>
    %c3 = arith.constant 3 : index
    %c0_18 = arith.constant 0 : index
    %c0_19 = arith.constant 0 : index
    %31 = vector.load %arg4[%c3, %c0_18, %c0_19] : memref<8x64x128xf32, #tpu.memory_space<vmem>>, vector<1x64x128xf32>
    %32 = vector.shape_cast %31 : vector<1x64x128xf32> to vector<64x128xf32>
    %cst_20 = arith.constant dense<0.000000e+00> : vector<56x128xf32>
    %33 = tpu.matmul %30, %32, %cst_20 {dimension_numbers = #tpu.dot_dimension_numbers<[1], [0], [0], [1], [0, 0, 1, 1], [], []>} : vector<56x64xf32>, vector<64x128xf32>, vector<56x128xf32> -> vector<56x128xf32>
    %34 = arith.addf %29, %33 : vector<56x128xf32>
    %35 = vector.extract_strided_slice %15 {offsets = [8, 0], sizes = [56, 64], strides = [1, 1]} : vector<71x64xf32> to vector<56x64xf32>
    %c4 = arith.constant 4 : index
    %c0_21 = arith.constant 0 : index
    %c0_22 = arith.constant 0 : index
    %36 = vector.load %arg4[%c4, %c0_21, %c0_22] : memref<8x64x128xf32, #tpu.memory_space<vmem>>, vector<1x64x128xf32>
    %37 = vector.shape_cast %36 : vector<1x64x128xf32> to vector<64x128xf32>
    %cst_23 = arith.constant dense<0.000000e+00> : vector<56x128xf32>
    %38 = tpu.matmul %35, %37, %cst_23 {dimension_numbers = #tpu.dot_dimension_numbers<[1], [0], [0], [1], [0, 0, 1, 1], [], []>} : vector<56x64xf32>, vector<64x128xf32>, vector<56x128xf32> -> vector<56x128xf32>
    %39 = arith.addf %34, %38 : vector<56x128xf32>
    %40 = vector.extract_strided_slice %15 {offsets = [10, 0], sizes = [56, 64], strides = [1, 1]} : vector<71x64xf32> to vector<56x64xf32>
    %c5 = arith.constant 5 : index
    %c0_24 = arith.constant 0 : index
    %c0_25 = arith.constant 0 : index
    %41 = vector.load %arg4[%c5, %c0_24, %c0_25] : memref<8x64x128xf32, #tpu.memory_space<vmem>>, vector<1x64x128xf32>
    %42 = vector.shape_cast %41 : vector<1x64x128xf32> to vector<64x128xf32>
    %cst_26 = arith.constant dense<0.000000e+00> : vector<56x128xf32>
    %43 = tpu.matmul %40, %42, %cst_26 {dimension_numbers = #tpu.dot_dimension_numbers<[1], [0], [0], [1], [0, 0, 1, 1], [], []>} : vector<56x64xf32>, vector<64x128xf32>, vector<56x128xf32> -> vector<56x128xf32>
    %44 = arith.addf %39, %43 : vector<56x128xf32>
    %45 = vector.extract_strided_slice %15 {offsets = [12, 0], sizes = [56, 64], strides = [1, 1]} : vector<71x64xf32> to vector<56x64xf32>
    %c6 = arith.constant 6 : index
    %c0_27 = arith.constant 0 : index
    %c0_28 = arith.constant 0 : index
    %46 = vector.load %arg4[%c6, %c0_27, %c0_28] : memref<8x64x128xf32, #tpu.memory_space<vmem>>, vector<1x64x128xf32>
    %47 = vector.shape_cast %46 : vector<1x64x128xf32> to vector<64x128xf32>
    %cst_29 = arith.constant dense<0.000000e+00> : vector<56x128xf32>
    %48 = tpu.matmul %45, %47, %cst_29 {dimension_numbers = #tpu.dot_dimension_numbers<[1], [0], [0], [1], [0, 0, 1, 1], [], []>} : vector<56x64xf32>, vector<64x128xf32>, vector<56x128xf32> -> vector<56x128xf32>
    %49 = arith.addf %44, %48 : vector<56x128xf32>
    %50 = vector.extract_strided_slice %15 {offsets = [14, 0], sizes = [56, 64], strides = [1, 1]} : vector<71x64xf32> to vector<56x64xf32>
    %c7 = arith.constant 7 : index
    %c0_30 = arith.constant 0 : index
    %c0_31 = arith.constant 0 : index
    %51 = vector.load %arg4[%c7, %c0_30, %c0_31] : memref<8x64x128xf32, #tpu.memory_space<vmem>>, vector<1x64x128xf32>
    %52 = vector.shape_cast %51 : vector<1x64x128xf32> to vector<64x128xf32>
    %cst_32 = arith.constant dense<0.000000e+00> : vector<56x128xf32>
    %53 = tpu.matmul %50, %52, %cst_32 {dimension_numbers = #tpu.dot_dimension_numbers<[1], [0], [0], [1], [0, 0, 1, 1], [], []>} : vector<56x64xf32>, vector<64x128xf32>, vector<56x128xf32> -> vector<56x128xf32>
    %54 = arith.addf %49, %53 : vector<56x128xf32>
    %c0_33 = arith.constant 0 : index
    %c0_34 = arith.constant 0 : index
    %55 = vector.load %arg5[%c0_33, %c0_34] : memref<1x128xf32, #tpu.memory_space<vmem>>, vector<1x128xf32>
    %56 = vector.broadcast %55 : vector<1x128xf32> to vector<56x128xf32>
    %57 = arith.addf %54, %56 : vector<56x128xf32>
    %cst_35 = arith.constant 0.000000e+00 : f32
    %58 = vector.broadcast %cst_35 : f32 to vector<56x128xf32>
    %59 = arith.maximumf %57, %58 : vector<56x128xf32>
    %60 = vector.extract_strided_slice %59 {offsets = [0, 0], sizes = [56, 64], strides = [1, 1]} : vector<56x128xf32> to vector<56x64xf32>
    %61 = vector.extract_strided_slice %59 {offsets = [0, 64], sizes = [56, 64], strides = [1, 1]} : vector<56x128xf32> to vector<56x64xf32>
    %62 = arith.maximumf %60, %61 : vector<56x64xf32>
    %63 = vector.extract_strided_slice %62 {offsets = [0, 0], sizes = [54, 64], strides = [1, 1]} : vector<56x64xf32> to vector<54x64xf32>
    %64 = vector.extract_strided_slice %62 {offsets = [2, 0], sizes = [54, 64], strides = [1, 1]} : vector<56x64xf32> to vector<54x64xf32>
    %65 = arith.maximumf %63, %64 : vector<54x64xf32>
    %66 = vector.extract_strided_slice %65 {offsets = [0, 0], sizes = [1, 64], strides = [1, 1]} : vector<54x64xf32> to vector<1x64xf32>
    %67 = vector.extract_strided_slice %65 {offsets = [4, 0], sizes = [1, 64], strides = [1, 1]} : vector<54x64xf32> to vector<1x64xf32>
    %68 = vector.extract_strided_slice %65 {offsets = [8, 0], sizes = [1, 64], strides = [1, 1]} : vector<54x64xf32> to vector<1x64xf32>
    %69 = vector.extract_strided_slice %65 {offsets = [12, 0], sizes = [1, 64], strides = [1, 1]} : vector<54x64xf32> to vector<1x64xf32>
    %70 = tpu.concatenate %66, %67, %68, %69 in 1 : vector<1x64xf32>, vector<1x64xf32>, vector<1x64xf32>, vector<1x64xf32> -> vector<1x256xf32>
    %71 = vector.extract_strided_slice %65 {offsets = [40, 0], sizes = [1, 64], strides = [1, 1]} : vector<54x64xf32> to vector<1x64xf32>
    %72 = vector.extract_strided_slice %65 {offsets = [44, 0], sizes = [1, 64], strides = [1, 1]} : vector<54x64xf32> to vector<1x64xf32>
    %73 = vector.extract_strided_slice %65 {offsets = [48, 0], sizes = [1, 64], strides = [1, 1]} : vector<54x64xf32> to vector<1x64xf32>
    %74 = vector.extract_strided_slice %65 {offsets = [52, 0], sizes = [1, 64], strides = [1, 1]} : vector<54x64xf32> to vector<1x64xf32>
    %75 = tpu.concatenate %71, %72, %73, %74 in 1 : vector<1x64xf32>, vector<1x64xf32>, vector<1x64xf32>, vector<1x64xf32> -> vector<1x256xf32>
    %76 = tpu.concatenate %70, %75 in 0 : vector<1x256xf32>, vector<1x256xf32> -> vector<2x256xf32>
    %c0_36 = arith.constant 0 : index
    %c0_37 = arith.constant 0 : index
    %77 = vector.load %arg6[%c0_36, %c0_37] : memref<256x2xf32, #tpu.memory_space<vmem>>, vector<256x2xf32>
    %cst_38 = arith.constant dense<0.000000e+00> : vector<2x2xf32>
    %78 = tpu.matmul %76, %77, %cst_38 {dimension_numbers = #tpu.dot_dimension_numbers<[1], [0], [0], [1], [0, 0, 1, 1], [], []>} : vector<2x256xf32>, vector<256x2xf32>, vector<2x2xf32> -> vector<2x2xf32>
    %c0_39 = arith.constant 0 : index
    %c0_40 = arith.constant 0 : index
    %79 = vector.load %arg7[%c0_39, %c0_40] : memref<1x2xf32, #tpu.memory_space<vmem>>, vector<1x2xf32>
    %80 = vector.broadcast %79 : vector<1x2xf32> to vector<2x2xf32>
    %81 = arith.addf %78, %80 : vector<2x2xf32>
    %cst_41 = arith.constant dense<0xFF800000> : vector<2xf32>
    %82 = vector.multi_reduction <maximumf>, %81, %cst_41 [1] : vector<2x2xf32> to vector<2xf32>
    %83 = vector.shape_cast %82 : vector<2xf32> to vector<2x1xf32>
    %84 = vector.broadcast %83 : vector<2x1xf32> to vector<2x2xf32>
    %85 = arith.subf %81, %84 : vector<2x2xf32>
    %86 = math.exp %85 : vector<2x2xf32>
    %cst_42 = arith.constant dense<0.000000e+00> : vector<2xf32>
    %87 = vector.multi_reduction <add>, %86, %cst_42 [1] : vector<2x2xf32> to vector<2xf32>
    %88 = vector.shape_cast %87 : vector<2xf32> to vector<2x1xf32>
    %89 = math.log %88 : vector<2x1xf32>
    %90 = vector.broadcast %89 : vector<2x1xf32> to vector<2x2xf32>
    %91 = arith.subf %85, %90 : vector<2x2xf32>
    %c0_43 = arith.constant 0 : index
    %c0_44 = arith.constant 0 : index
    %92 = vector.load %arg8[%c0_43, %c0_44] : memref<2x2xf32, #tpu.memory_space<vmem>>, vector<2x2xf32>
    tpu.vector_store %arg8[%c0_43, %c0_44], %91 {strides = array<i32>} : memref<2x2xf32, #tpu.memory_space<vmem>>, vector<2x2xf32>,
    return
  }
}

</mosaic_0001>

<llo_original>
// kernel: tpu_custom_call.1
$region0: #{tpu_custom_call.1}
  #allocation0 [shape = 'u32[]', space=smem, size = 0x4, offset = 0x4, fixed_abs, tag = 'smem constant byte address 0x4 - core index']
  #allocation1 [shape = 'u32[144,128]{1,0:T(1,128)}', space=vmem, size = 0x12000, scoped, tag = 'internal scratch']
  %s0 = inlined_call_operand.hbm [shape: f32[72,256], index: 0, kind: input, shape index: {}]
  %s1 = inlined_call_operand.vmem [shape: f32[256,128], index: 1, kind: input, shape index: {}]
  %s2 = inlined_call_operand.vmem [shape: f32[1,128], index: 2, kind: input, shape index: {}]
  %s3 = inlined_call_operand.vmem [shape: f32[71,64], index: 3, kind: input, shape index: {}]
  %s4 = inlined_call_operand.hbm [shape: f32[8,64,128], index: 4, kind: input, shape index: {}]
  %s5 = inlined_call_operand.vmem [shape: f32[1,128], index: 5, kind: input, shape index: {}]
  %s6 = inlined_call_operand.vmem [shape: f32[256,2], index: 6, kind: input, shape index: {}]
  %s7 = inlined_call_operand.vmem [shape: f32[1,2], index: 7, kind: input, shape index: {}]
  %s8 = inlined_call_operand.hbm [shape: f32[2,2], index: 8, kind: output, shape index: {}]
  %s9 = sld [smem:[#allocation0]]
  $region50: #{tpu_custom_call.1} parent=0
    _
  %s11 = ssub.s32 1, %s9
  %s12 = scalar_select 0, %s11, %s9
  $region1: #{tpu_custom_call.1} parent=0
    #allocation2 [shape = 'u8[73728]{0}', space=vmem, size = 0x12000, scoped, tag = 'input window, operand 0, single buffered']
    #allocation3 [shape = 's32[1]{0}', space=sflag, size = 0x4, scoped, tag = 'scoped memory for tpu_custom_call.1']
    #allocation4 [shape = 's32[1]{0}', space=sflag, size = 0x4, scoped, tag = 'scoped memory for tpu_custom_call.1']
    #allocation5 [shape = 'u8[262144]{0}', space=vmem, size = 0x40000, scoped, tag = 'input window, operand 4, single buffered']
    #allocation6 [shape = 's32[1]{0}', space=sflag, size = 0x4, scoped, tag = 'scoped memory for tpu_custom_call.1']
    #allocation7 [shape = 'u8[1024]{0}', space=vmem, size = 0x400, scoped, tag = 'output window, operand 0, single buffered']
    %13 = vsyncpa [#allocation3], 0
    %14 = vsyncpa [#allocation6], 0
    %15 = vsyncpa [#allocation4], 0
    // Predicated region
    $region2: #{tpu_custom_call.1} parent=1 // pred_check
      _
    $region3: #{tpu_custom_call.1} parent=1 // pred_check_branch
      %17 = sbr.rel (0) target = $region5
    $region4: #{tpu_custom_call.1} parent=1 // pred_region
      %s19 = ssub.s32 2304, 2304
      %20 = vsyncadd [#allocation3], %s19
      %s21 = sshll.u32 [#allocation2], 4
      %s22 = int_to_ptr.vmem [resolvable:$true] %s21
      %27 = dma.hbm_to_vmem [thread:$0]  %s0, 2304, %s22, [#allocation3], 256, 256, 16
    $region5: #{tpu_custom_call.1} parent=1 // pred_fallthru
      _
    // Predicated region
    $region6: #{tpu_custom_call.1} parent=1 // pred_check
      _
    $region7: #{tpu_custom_call.1} parent=1 // pred_check_branch
      %29 = sbr.rel (0) target = $region9
    $region8: #{tpu_custom_call.1} parent=1 // pred_region
      _
    $region9: #{tpu_custom_call.1} parent=1 // pred_fallthru
      _
    // Predicated region
    $region10: #{tpu_custom_call.1} parent=1 // pred_check
      _
    $region11: #{tpu_custom_call.1} parent=1 // pred_check_branch
      %31 = sbr.rel (0) target = $region13
    $region12: #{tpu_custom_call.1} parent=1 // pred_region
      _
    $region13: #{tpu_custom_call.1} parent=1 // pred_fallthru
      _
    // Predicated region
    $region14: #{tpu_custom_call.1} parent=1 // pred_check
      _
    $region15: #{tpu_custom_call.1} parent=1 // pred_check_branch
      %33 = sbr.rel (0) target = $region17
    $region16: #{tpu_custom_call.1} parent=1 // pred_region
      _
    $region17: #{tpu_custom_call.1} parent=1 // pred_fallthru
      _
    // Predicated region
    $region18: #{tpu_custom_call.1} parent=1 // pred_check
      _
    $region19: #{tpu_custom_call.1} parent=1 // pred_check_branch
      %35 = sbr.rel (0) target = $region21
    $region20: #{tpu_custom_call.1} parent=1 // pred_region
      %s37 = ssub.s32 8192, 8192
      %38 = vsyncadd [#allocation6], %s37
      %s39 = sshll.u32 [#allocation5], 4
      %s40 = int_to_ptr.vmem [resolvable:$true] %s39
      %45 = dma.hbm_to_vmem [thread:$0]  %s4, 8192, %s40, [#allocation6], 128, 128, 8
    $region21: #{tpu_custom_call.1} parent=1 // pred_fallthru
      _
    // Predicated region
    $region22: #{tpu_custom_call.1} parent=1 // pred_check
      _
    $region23: #{tpu_custom_call.1} parent=1 // pred_check_branch
      %47 = sbr.rel (0) target = $region25
    $region24: #{tpu_custom_call.1} parent=1 // pred_region
      _
    $region25: #{tpu_custom_call.1} parent=1 // pred_fallthru
      _
    // Predicated region
    $region26: #{tpu_custom_call.1} parent=1 // pred_check
      _
    $region27: #{tpu_custom_call.1} parent=1 // pred_check_branch
      %49 = sbr.rel (0) target = $region29
    $region28: #{tpu_custom_call.1} parent=1 // pred_region
      _
    $region29: #{tpu_custom_call.1} parent=1 // pred_fallthru
      _
    // Predicated region
    $region30: #{tpu_custom_call.1} parent=1 // pred_check
      _
    $region31: #{tpu_custom_call.1} parent=1 // pred_check_branch
      %51 = sbr.rel (0) target = $region33
    $region32: #{tpu_custom_call.1} parent=1 // pred_region
      _
    $region33: #{tpu_custom_call.1} parent=1 // pred_fallthru
      _
    // Predicated region
    $region34: #{tpu_custom_call.1} parent=1 // pred_check
      _
    $region35: #{tpu_custom_call.1} parent=1 // pred_check_branch
      %53 = sbr.rel (0) target = $region37
    $region36: #{tpu_custom_call.1} parent=1 // pred_region
      %54 = dma.done [#allocation3], 2304
    $region37: #{tpu_custom_call.1} parent=1 // pred_fallthru
      _
    // Predicated region
    $region38: #{tpu_custom_call.1} parent=1 // pred_check
      _
    $region39: #{tpu_custom_call.1} parent=1 // pred_check_branch
      %56 = sbr.rel (0) target = $region41
    $region40: #{tpu_custom_call.1} parent=1 // pred_region
      %57 = dma.done [#allocation6], 8192
    $region41: #{tpu_custom_call.1} parent=1 // pred_fallthru
      _
    %v58 = vld [vmem:[#allocation2] sm:$0xff]
    %v59 = vld [vmem:[#allocation2 + $0x8] sm:$0xff]
    %v60 = vld [vmem:[#allocation2 + $0x10] sm:$0xff]
    %v61 = vld [vmem:[#allocation2 + $0x18] sm:$0xff]
    %v62 = vld [vmem:[#allocation2 + $0x20] sm:$0xff]
    %v63 = vld [vmem:[#allocation2 + $0x28] sm:$0xff]
    %v64 = vld [vmem:[#allocation2 + $0x30] sm:$0xff]
    %v65 = vld [vmem:[#allocation2 + $0x38] sm:$0xff]
    %v66 = vld [vmem:[#allocation2 + $0x40] sm:$0xff]
    %v67 = vld [vmem:[#allocation2 + $0x48] sm:$0xff]
    %v68 = vld [vmem:[#allocation2 + $0x50] sm:$0xff]
    %v69 = vld [vmem:[#allocation2 + $0x58] sm:$0xff]
    %v70 = vld [vmem:[#allocation2 + $0x60] sm:$0xff]
    %v71 = vld [vmem:[#allocation2 + $0x68] sm:$0xff]
    %v72 = vld [vmem:[#allocation2 + $0x70] sm:$0xff]
    %v73 = vld [vmem:[#allocation2 + $0x78] sm:$0xff]
    %v74 = vld [vmem:[#allocation2 + $0x80] sm:$0xff]
    %v75 = vld [vmem:[#allocation2 + $0x88] sm:$0xff]
    %v76 = vld [vmem:[%s1] sm:$0xff]
    %v77 = vld [vmem:[%s1 + $0x8] sm:$0xff]
    %v78 = vld [vmem:[%s1 + $0x10] sm:$0xff]
    %v79 = vld [vmem:[%s1 + $0x18] sm:$0xff]
    %v80 = vld [vmem:[%s1 + $0x20] sm:$0xff]
    %v81 = vld [vmem:[%s1 + $0x28] sm:$0xff]
    %v82 = vld [vmem:[%s1 + $0x30] sm:$0xff]
    %v83 = vld [vmem:[%s1 + $0x38] sm:$0xff]
    %v84 = vld [vmem:[%s1 + $0x40] sm:$0xff]
    %v85 = vld [vmem:[%s1 + $0x48] sm:$0xff]
    %v86 = vld [vmem:[%s1 + $0x50] sm:$0xff]
    %v87 = vld [vmem:[%s1 + $0x58] sm:$0xff]
    %v88 = vld [vmem:[%s1 + $0x60] sm:$0xff]
    %v89 = vld [vmem:[%s1 + $0x68] sm:$0xff]
    %v90 = vld [vmem:[%s1 + $0x70] sm:$0xff]
    %v91 = vld [vmem:[%s1 + $0x78] sm:$0xff]
    %v92 = vld [vmem:[%s1 + $0x80] sm:$0xff]
    %v93 = vld [vmem:[%s1 + $0x88] sm:$0xff]
    %v94 = vld [vmem:[%s1 + $0x90] sm:$0xff]
    %v95 = vld [vmem:[%s1 + $0x98] sm:$0xff]
    %v96 = vld [vmem:[%s1 + $0xa0] sm:$0xff]
    %v97 = vld [vmem:[%s1 + $0xa8] sm:$0xff]
    %v98 = vld [vmem:[%s1 + $0xb0] sm:$0xff]
    %v99 = vld [vmem:[%s1 + $0xb8] sm:$0xff]
    %v100 = vld [vmem:[%s1 + $0xc0] sm:$0xff]
    %v101 = vld [vmem:[%s1 + $0xc8] sm:$0xff]
    %v102 = vld [vmem:[%s1 + $0xd0] sm:$0xff]
    %v103 = vld [vmem:[%s1 + $0xd8] sm:$0xff]
    %v104 = vld [vmem:[%s1 + $0xe0] sm:$0xff]
    %v105 = vld [vmem:[%s1 + $0xe8] sm:$0xff]
    %v106 = vld [vmem:[%s1 + $0xf0] sm:$0xff]
    %v107 = vld [vmem:[%s1 + $0xf8] sm:$0xff]
    %v108 = vld [vmem:[%s2] sm:$0x1]
    %v110 = vlaneseq
    %v111 = vshrl.u32 %v110, 7
    %v112 = vsub.s32 0, %v111
    %v113 = vrot.slane %v108, %v112
    %115 = vmatprep.subr.mxu0 0.0
    %116 = vmatpush1.msra.mxu0 %v91
    %117 = vmatprep.subr.mxu0 0.0
    %118 = vmatpush1.msra.mxu0 %v90
    %119 = vmatprep.subr.mxu0 0.0
    %120 = vmatpush1.msra.mxu0 %v89
    %121 = vmatprep.subr.mxu0 0.0
    %122 = vmatpush1.msra.mxu0 %v88
    %123 = vmatprep.subr.mxu0 0.0
    %124 = vmatpush1.msra.mxu0 %v87
    %125 = vmatprep.subr.mxu0 0.0
    %126 = vmatpush1.msra.mxu0 %v86
    %127 = vmatprep.subr.mxu0 0.0
    %128 = vmatpush1.msra.mxu0 %v85
    %129 = vmatprep.subr.mxu0 0.0
    %130 = vmatpush1.msra.mxu0 %v84
    %131 = vmatprep.subr.mxu0 0.0
    %132 = vmatpush1.msra.mxu0 %v83
    %133 = vmatprep.subr.mxu0 0.0
    %134 = vmatpush1.msra.mxu0 %v82
    %135 = vmatprep.subr.mxu0 0.0
    %136 = vmatpush1.msra.mxu0 %v81
    %137 = vmatprep.subr.mxu0 0.0
    %138 = vmatpush1.msra.mxu0 %v80
    %139 = vmatprep.subr.mxu0 0.0
    %140 = vmatpush1.msra.mxu0 %v79
    %141 = vmatprep.subr.mxu0 0.0
    %142 = vmatpush1.msra.mxu0 %v78
    %143 = vmatprep.subr.mxu0 0.0
    %144 = vmatpush1.msra.mxu0 %v77
    %145 = vmatprep.subr.mxu0 0.0
    %146 = vmatpush1.msra.mxu0 %v76
    %147 = vmatprep.subr.mxu0 0.0
    %148 = vmatpush2.msra.mxu0 %v107
    %149 = vmatprep.subr.mxu0 0.0
    %150 = vmatpush2.msra.mxu0 %v106
    %151 = vmatprep.subr.mxu0 0.0
    %152 = vmatpush2.msra.mxu0 %v105
    %153 = vmatprep.subr.mxu0 0.0
    %154 = vmatpush2.msra.mxu0 %v104
    %155 = vmatprep.subr.mxu0 0.0
    %156 = vmatpush2.msra.mxu0 %v103
    %157 = vmatprep.subr.mxu0 0.0
    %158 = vmatpush2.msra.mxu0 %v102
    %159 = vmatprep.subr.mxu0 0.0
    %160 = vmatpush2.msra.mxu0 %v101
    %161 = vmatprep.subr.mxu0 0.0
    %162 = vmatpush2.msra.mxu0 %v100
    %163 = vmatprep.subr.mxu0 0.0
    %164 = vmatpush2.msra.mxu0 %v99
    %165 = vmatprep.subr.mxu0 0.0
    %166 = vmatpush2.msra.mxu0 %v98
    %167 = vmatprep.subr.mxu0 0.0
    %168 = vmatpush2.msra.mxu0 %v97
    %169 = vmatprep.subr.mxu0 0.0
    %170 = vmatpush2.msra.mxu0 %v96
    %171 = vmatprep.subr.mxu0 0.0
    %172 = vmatpush2.msra.mxu0 %v95
    %173 = vmatprep.subr.mxu0 0.0
    %174 = vmatpush2.msra.mxu0 %v94
    %175 = vmatprep.subr.mxu0 0.0
    %176 = vmatpush2.msra.mxu0 %v93
    %177 = vmatprep.subr.mxu0 0.0
    %178 = vmatpush2.msra.mxu0 %v92
    %179 = vmatprep.mubr.f32.mxu0 %v59
    %180 = vmatmul.mubr.f32.gmra.mxu0 %v58
    %v181 = vpop.f32.mrf.mxu0
    %v182 = vadd.f32 %v113, %v181
    %v183 = vpop.f32.mrf.mxu0
    %184 = vmatprep.mubr.f32.mxu0 %v61
    %185 = vmatmul.mubr.f32.gmra.mxu0 %v60
    %v186 = vpop.f32.mrf.mxu0
    %v187 = vadd.f32 %v113, %v186
    %v188 = vpop.f32.mrf.mxu0
    %189 = vmatprep.mubr.f32.mxu0 %v63
    %190 = vmatmul.mubr.f32.gmra.mxu0 %v62
    %v191 = vpop.f32.mrf.mxu0
    %v192 = vadd.f32 %v113, %v191
    %v193 = vpop.f32.mrf.mxu0
    %194 = vmatprep.mubr.f32.mxu0 %v65
    %195 = vmatmul.mubr.f32.gmra.mxu0 %v64
    %v196 = vpop.f32.mrf.mxu0
    %v197 = vadd.f32 %v113, %v196
    %v198 = vpop.f32.mrf.mxu0
    %199 = vmatprep.mubr.f32.mxu0 %v67
    %200 = vmatmul.mubr.f32.gmra.mxu0 %v66
    %v201 = vpop.f32.mrf.mxu0
    %v202 = vadd.f32 %v113, %v201
    %v203 = vpop.f32.mrf.mxu0
    %204 = vmatprep.mubr.f32.mxu0 %v69
    %205 = vmatmul.mubr.f32.gmra.mxu0 %v68
    %v206 = vpop.f32.mrf.mxu0
    %v207 = vadd.f32 %v113, %v206
    %v208 = vpop.f32.mrf.mxu0
    %209 = vmatprep.mubr.f32.mxu0 %v71
    %210 = vmatmul.mubr.f32.gmra.mxu0 %v70
    %v211 = vpop.f32.mrf.mxu0
    %v212 = vadd.f32 %v113, %v211
    %v213 = vpop.f32.mrf.mxu0
    %214 = vmatprep.mubr.f32.mxu0 %v73
    %215 = vmatmul.mubr.f32.gmra.mxu0 %v72
    %v216 = vpop.f32.mrf.mxu0
    %v217 = vadd.f32 %v113, %v216
    %v218 = vpop.f32.mrf.mxu0
    %219 = vmatprep.mubr.f32.mxu0 %v75
    %220 = vmatmul.mubr.f32.gmra.mxu0 %v74
    %v221 = vpop.f32.mrf.mxu0
    %v222 = vadd.f32 %v113, %v221
    %v223 = vpop.f32.mrf.mxu0
    %224 = vdwg.mxu0
    %v225 = vmax.f32 %v182, 0.0
    %v226 = vmax.f32 %v187, 0.0
    %v227 = vmax.f32 %v192, 0.0
    %v228 = vmax.f32 %v197, 0.0
    %v229 = vmax.f32 %v202, 0.0
    %v230 = vmax.f32 %v207, 0.0
    %v231 = vmax.f32 %v212, 0.0
    %v232 = vmax.f32 %v217, 0.0
    %v233 = vmax.f32 %v222, 0.0
    %243 = vrot.lane.b32.xlu0 %v225, 64
    %v244 = vpop.permute.xlu0 %243
    %245 = vrot.lane.b32.xlu0 %v226, 64
    %v246 = vpop.permute.xlu0 %245
    %247 = vrot.lane.b32.xlu0 %v227, 64
    %v248 = vpop.permute.xlu0 %247
    %249 = vrot.lane.b32.xlu0 %v228, 64
    %v250 = vpop.permute.xlu0 %249
    %251 = vrot.lane.b32.xlu0 %v229, 64
    %v252 = vpop.permute.xlu0 %251
    %253 = vrot.lane.b32.xlu0 %v230, 64
    %v254 = vpop.permute.xlu0 %253
    %255 = vrot.lane.b32.xlu0 %v231, 64
    %v256 = vpop.permute.xlu0 %255
    %257 = vrot.lane.b32.xlu0 %v232, 64
    %v258 = vpop.permute.xlu0 %257
    %259 = vrot.lane.b32.xlu0 %v233, 64
    %v260 = vpop.permute.xlu0 %259
    %v270 = vmax.f32 %v225, %v244
    %v271 = vmax.f32 %v226, %v246
    %v272 = vmax.f32 %v227, %v248
    %v273 = vmax.f32 %v228, %v250
    %v274 = vmax.f32 %v229, %v252
    %v275 = vmax.f32 %v230, %v254
    %v276 = vmax.f32 %v231, %v256
    %v277 = vmax.f32 %v232, %v258
    %v278 = vmax.f32 %v233, %v260
    %vm288 = vcmask 1046528
    %v289 = vrot.slane %v270, 1
    %v290 = vrot.slane %v271, 1
    %v291 = vsel %vm288, %v289, %v290
    %v292 = vrot.slane %v272, 1
    %v293 = vsel %vm288, %v290, %v292
    %v294 = vrot.slane %v273, 1
    %v295 = vsel %vm288, %v292, %v294
    %v296 = vrot.slane %v274, 1
    %v297 = vsel %vm288, %v294, %v296
    %v298 = vrot.slane %v275, 1
    %v299 = vsel %vm288, %v296, %v298
    %v300 = vrot.slane %v276, 1
    %v301 = vsel %vm288, %v298, %v300
    %v302 = vrot.slane %v277, 1
    %v303 = vsel %vm288, %v300, %v302
    %v304 = vrot.slane %v278, 1
    %v305 = vsel %vm288, %v302, %v304
    %v315 = vmax.f32 %v270, %v291
    %v316 = vmax.f32 %v271, %v293
    %v317 = vmax.f32 %v272, %v295
    %v318 = vmax.f32 %v273, %v297
    %v319 = vmax.f32 %v274, %v299
    %v320 = vmax.f32 %v275, %v301
    %v321 = vmax.f32 %v276, %v303
    %v322 = vmax.f32 %v277, %v305
    %v323 = vmax.f32 %v278, %v304
    %v324 = vld [vmem:[%s3] sm:$0xff]
    %v325 = vld [vmem:[%s3 + $0x8] sm:$0xff]
    %v326 = vld [vmem:[%s3 + $0x10] sm:$0xff]
    %v327 = vld [vmem:[%s3 + $0x18] sm:$0xff]
    %v328 = vld [vmem:[%s3 + $0x20] sm:$0xff]
    %v329 = vld [vmem:[%s3 + $0x28] sm:$0xff]
    %v330 = vld [vmem:[%s3 + $0x30] sm:$0xff]
    %v331 = vld [vmem:[%s3 + $0x38] sm:$0xff]
    %v332 = vld [vmem:[%s3 + $0x40] sm:$0x7f]
    %v333 = vmul.f32 %v315, %v324
    %v334 = vmul.f32 %v316, %v325
    %v335 = vmul.f32 %v317, %v326
    %v336 = vmul.f32 %v318, %v327
    %v337 = vmul.f32 %v319, %v328
    %v338 = vmul.f32 %v320, %v329
    %v339 = vmul.f32 %v321, %v330
    %v340 = vmul.f32 %v322, %v331
    %v341 = vmul.f32 %v323, %v332
    %v342 = vld [vmem:[#allocation5] sm:$0xff]
    %v343 = vld [vmem:[#allocation5 + $0x8] sm:$0xff]
    %v344 = vld [vmem:[#allocation5 + $0x10] sm:$0xff]
    %v345 = vld [vmem:[#allocation5 + $0x18] sm:$0xff]
    %v346 = vld [vmem:[#allocation5 + $0x20] sm:$0xff]
    %v347 = vld [vmem:[#allocation5 + $0x28] sm:$0xff]
    %v348 = vld [vmem:[#allocation5 + $0x30] sm:$0xff]
    %v349 = vld [vmem:[#allocation5 + $0x38] sm:$0xff]
    %s350 = scalar_lea.vmem [#allocation5], 64
    %v351 = vld [vmem:[%s350] sm:$0xff]
    %v352 = vld [vmem:[%s350 + $0x8] sm:$0xff]
    %v353 = vld [vmem:[%s350 + $0x10] sm:$0xff]
    %v354 = vld [vmem:[%s350 + $0x18] sm:$0xff]
    %v355 = vld [vmem:[%s350 + $0x20] sm:$0xff]
    %v356 = vld [vmem:[%s350 + $0x28] sm:$0xff]
    %v357 = vld [vmem:[%s350 + $0x30] sm:$0xff]
    %v358 = vld [vmem:[%s350 + $0x38] sm:$0xff]
    %vm367 = vcmask 1045504
    %v368 = vrot.slane %v333, 2
    %v369 = vrot.slane %v334, 2
    %v370 = vsel %vm367, %v368, %v369
    %v371 = vrot.slane %v335, 2
    %v372 = vsel %vm367, %v369, %v371
    %v373 = vrot.slane %v336, 2
    %v374 = vsel %vm367, %v371, %v373
    %v375 = vrot.slane %v337, 2
    %v376 = vsel %vm367, %v373, %v375
    %v377 = vrot.slane %v338, 2
    %v378 = vsel %vm367, %v375, %v377
    %v379 = vrot.slane %v339, 2
    %v380 = vsel %vm367, %v377, %v379
    %v381 = vrot.slane %v340, 2
    %v382 = vsel %vm367, %v379, %v381
    %vm383 = vcmask 523264
    %v384 = vsel %vm383, %v370, 0
    %v386 = vsel %vm383, %v372, 0
    %v388 = vsel %vm383, %v374, 0
    %v390 = vsel %vm383, %v376, 0
    %v392 = vsel %vm383, %v378, 0
    %v394 = vsel %vm383, %v380, 0
    %v396 = vsel %vm383, %v382, 0
    %398 = vmatprep.subr.mxu0 0.0
    %399 = vmatpush1.msra.mxu0 0.0
    %400 = vmatprep.subr.mxu0 0.0
    %401 = vmatpush1.msra.mxu0 0.0
    %402 = vmatprep.subr.mxu0 0.0
    %403 = vmatpush1.msra.mxu0 0.0
    %404 = vmatprep.subr.mxu0 0.0
    %405 = vmatpush1.msra.mxu0 0.0
    %406 = vmatprep.subr.mxu0 0.0
    %407 = vmatpush1.msra.mxu0 0.0
    %408 = vmatprep.subr.mxu0 0.0
    %409 = vmatpush1.msra.mxu0 0.0
    %410 = vmatprep.subr.mxu0 0.0
    %411 = vmatpush1.msra.mxu0 0.0
    %412 = vmatprep.subr.mxu0 0.0
    %413 = vmatpush1.msra.mxu0 0.0
    %414 = vmatprep.subr.mxu0 0.0
    %415 = vmatpush1.msra.mxu0 %v358
    %416 = vmatprep.subr.mxu0 0.0
    %417 = vmatpush1.msra.mxu0 %v357
    %418 = vmatprep.subr.mxu0 0.0
    %419 = vmatpush1.msra.mxu0 %v356
    %420 = vmatprep.subr.mxu0 0.0
    %421 = vmatpush1.msra.mxu0 %v355
    %422 = vmatprep.subr.mxu0 0.0
    %423 = vmatpush1.msra.mxu0 %v354
    %424 = vmatprep.subr.mxu0 0.0
    %425 = vmatpush1.msra.mxu0 %v353
    %426 = vmatprep.subr.mxu0 0.0
    %427 = vmatpush1.msra.mxu0 %v352
    %428 = vmatprep.subr.mxu0 0.0
    %429 = vmatpush1.msra.mxu0 %v351
    %430 = vmatprep.subr.mxu0 0.0
    %431 = vmatpush2.msra.mxu0 0.0
    %432 = vmatprep.subr.mxu0 0.0
    %433 = vmatpush2.msra.mxu0 0.0
    %434 = vmatprep.subr.mxu0 0.0
    %435 = vmatpush2.msra.mxu0 0.0
    %436 = vmatprep.subr.mxu0 0.0
    %437 = vmatpush2.msra.mxu0 0.0
    %438 = vmatprep.subr.mxu0 0.0
    %439 = vmatpush2.msra.mxu0 0.0
    %440 = vmatprep.subr.mxu0 0.0
    %441 = vmatpush2.msra.mxu0 0.0
    %442 = vmatprep.subr.mxu0 0.0
    %443 = vmatpush2.msra.mxu0 0.0
    %444 = vmatprep.subr.mxu0 0.0
    %445 = vmatpush2.msra.mxu0 0.0
    %446 = vmatprep.subr.mxu0 0.0
    %447 = vmatpush2.msra.mxu0 0.0
    %448 = vmatprep.subr.mxu0 0.0
    %449 = vmatpush2.msra.mxu0 0.0
    %450 = vmatprep.subr.mxu0 0.0
    %451 = vmatpush2.msra.mxu0 0.0
    %452 = vmatprep.subr.mxu0 0.0
    %453 = vmatpush2.msra.mxu0 0.0
    %454 = vmatprep.subr.mxu0 0.0
    %455 = vmatpush2.msra.mxu0 0.0
    %456 = vmatprep.subr.mxu0 0.0
    %457 = vmatpush2.msra.mxu0 0.0
    %458 = vmatprep.subr.mxu0 0.0
    %459 = vmatpush2.msra.mxu0 0.0
    %460 = vmatprep.subr.mxu0 0.0
    %461 = vmatpush2.msra.mxu0 0.0
    %462 = vmatprep.mubr.f32.mxu0 0.0
    %463 = vmatmul.mubr.f32.gmra.mxu0 %v384
    %v464 = vpop.f32.mrf.mxu0
    %v465 = vadd.f32 0.0, %v464
    %v466 = vpop.f32.mrf.mxu0
    %467 = vmatprep.mubr.f32.mxu0 0.0
    %468 = vmatmul.mubr.f32.gmra.mxu0 %v386
    %v469 = vpop.f32.mrf.mxu0
    %v470 = vadd.f32 0.0, %v469
    %v471 = vpop.f32.mrf.mxu0
    %472 = vmatprep.mubr.f32.mxu0 0.0
    %473 = vmatmul.mubr.f32.gmra.mxu0 %v388
    %v474 = vpop.f32.mrf.mxu0
    %v475 = vadd.f32 0.0, %v474
    %v476 = vpop.f32.mrf.mxu0
    %477 = vmatprep.mubr.f32.mxu0 0.0
    %478 = vmatmul.mubr.f32.gmra.mxu0 %v390
    %v479 = vpop.f32.mrf.mxu0
    %v480 = vpop.f32.mrf.mxu0
    %481 = vmatprep.mubr.f32.mxu0 0.0
    %482 = vmatmul.mubr.f32.gmra.mxu0 %v392
    %v483 = vpop.f32.mrf.mxu0
    %v484 = vpop.f32.mrf.mxu0
    %485 = vmatprep.mubr.f32.mxu0 0.0
    %486 = vmatmul.mubr.f32.gmra.mxu0 %v394
    %v487 = vpop.f32.mrf.mxu0
    %v488 = vadd.f32 0.0, %v487
    %v489 = vpop.f32.mrf.mxu0
    %490 = vmatprep.mubr.f32.mxu0 0.0
    %491 = vmatmul.mubr.f32.gmra.mxu0 %v396
    %v492 = vpop.f32.mrf.mxu0
    %v493 = vadd.f32 0.0, %v492
    %v494 = vpop.f32.mrf.mxu0
    %495 = vdwg.mxu0
    %v496 = vsel %vm383, %v333, 0
    %v498 = vsel %vm383, %v334, 0
    %v500 = vsel %vm383, %v335, 0
    %v502 = vsel %vm383, %v336, 0
    %v504 = vsel %vm383, %v337, 0
    %v506 = vsel %vm383, %v338, 0
    %v508 = vsel %vm383, %v339, 0
    %510 = vmatprep.subr.mxu0 0.0
    %511 = vmatpush1.msra.mxu0 0.0
    %512 = vmatprep.subr.mxu0 0.0
    %513 = vmatpush1.msra.mxu0 0.0
    %514 = vmatprep.subr.mxu0 0.0
    %515 = vmatpush1.msra.mxu0 0.0
    %516 = vmatprep.subr.mxu0 0.0
    %517 = vmatpush1.msra.mxu0 0.0
    %518 = vmatprep.subr.mxu0 0.0
    %519 = vmatpush1.msra.mxu0 0.0
    %520 = vmatprep.subr.mxu0 0.0
    %521 = vmatpush1.msra.mxu0 0.0
    %522 = vmatprep.subr.mxu0 0.0
    %523 = vmatpush1.msra.mxu0 0.0
    %524 = vmatprep.subr.mxu0 0.0
    %525 = vmatpush1.msra.mxu0 0.0
    %526 = vmatprep.subr.mxu0 0.0
    %527 = vmatpush1.msra.mxu0 %v349
    %528 = vmatprep.subr.mxu0 0.0
    %529 = vmatpush1.msra.mxu0 %v348
    %530 = vmatprep.subr.mxu0 0.0
    %531 = vmatpush1.msra.mxu0 %v347
    %532 = vmatprep.subr.mxu0 0.0
    %533 = vmatpush1.msra.mxu0 %v346
    %534 = vmatprep.subr.mxu0 0.0
    %535 = vmatpush1.msra.mxu0 %v345
    %536 = vmatprep.subr.mxu0 0.0
    %537 = vmatpush1.msra.mxu0 %v344
    %538 = vmatprep.subr.mxu0 0.0
    %539 = vmatpush1.msra.mxu0 %v343
    %540 = vmatprep.subr.mxu0 0.0
    %541 = vmatpush1.msra.mxu0 %v342
    %542 = vmatprep.subr.mxu0 0.0
    %543 = vmatpush2.msra.mxu0 0.0
    %544 = vmatprep.subr.mxu0 0.0
    %545 = vmatpush2.msra.mxu0 0.0
    %546 = vmatprep.subr.mxu0 0.0
    %547 = vmatpush2.msra.mxu0 0.0
    %548 = vmatprep.subr.mxu0 0.0
    %549 = vmatpush2.msra.mxu0 0.0
    %550 = vmatprep.subr.mxu0 0.0
    %551 = vmatpush2.msra.mxu0 0.0
    %552 = vmatprep.subr.mxu0 0.0
    %553 = vmatpush2.msra.mxu0 0.0
    %554 = vmatprep.subr.mxu0 0.0
    %555 = vmatpush2.msra.mxu0 0.0
    %556 = vmatprep.subr.mxu0 0.0
    %557 = vmatpush2.msra.mxu0 0.0
    %558 = vmatprep.subr.mxu0 0.0
    %559 = vmatpush2.msra.mxu0 0.0
    %560 = vmatprep.subr.mxu0 0.0
    %561 = vmatpush2.msra.mxu0 0.0
    %562 = vmatprep.subr.mxu0 0.0
    %563 = vmatpush2.msra.mxu0 0.0
    %564 = vmatprep.subr.mxu0 0.0
    %565 = vmatpush2.msra.mxu0 0.0
    %566 = vmatprep.subr.mxu0 0.0
    %567 = vmatpush2.msra.mxu0 0.0
    %568 = vmatprep.subr.mxu0 0.0
    %569 = vmatpush2.msra.mxu0 0.0
    %570 = vmatprep.subr.mxu0 0.0
    %571 = vmatpush2.msra.mxu0 0.0
    %572 = vmatprep.subr.mxu0 0.0
    %573 = vmatpush2.msra.mxu0 0.0
    %574 = vmatprep.mubr.f32.mxu0 0.0
    %575 = vmatmul.mubr.f32.gmra.mxu0 %v496
    %v576 = vpop.f32.mrf.mxu0
    %v577 = vadd.f32 %v465, %v576
    %v578 = vpop.f32.mrf.mxu0
    %579 = vmatprep.mubr.f32.mxu0 0.0
    %580 = vmatmul.mubr.f32.gmra.mxu0 %v498
    %v581 = vpop.f32.mrf.mxu0
    %v582 = vadd.f32 %v470, %v581
    %v583 = vpop.f32.mrf.mxu0
    %584 = vmatprep.mubr.f32.mxu0 0.0
    %585 = vmatmul.mubr.f32.gmra.mxu0 %v500
    %v586 = vpop.f32.mrf.mxu0
    %v587 = vadd.f32 %v475, %v586
    %v588 = vpop.f32.mrf.mxu0
    %589 = vmatprep.mubr.f32.mxu0 0.0
    %590 = vmatmul.mubr.f32.gmra.mxu0 %v502
    %v591 = vpop.f32.mrf.mxu0
    %v592 = vpop.f32.mrf.mxu0
    %593 = vmatprep.mubr.f32.mxu0 0.0
    %594 = vmatmul.mubr.f32.gmra.mxu0 %v504
    %v595 = vpop.f32.mrf.mxu0
    %v596 = vpop.f32.mrf.mxu0
    %597 = vmatprep.mubr.f32.mxu0 0.0
    %598 = vmatmul.mubr.f32.gmra.mxu0 %v506
    %v599 = vpop.f32.mrf.mxu0
    %v600 = vadd.f32 %v488, %v599
    %v601 = vpop.f32.mrf.mxu0
    %602 = vmatprep.mubr.f32.mxu0 0.0
    %603 = vmatmul.mubr.f32.gmra.mxu0 %v508
    %v604 = vpop.f32.mrf.mxu0
    %v605 = vadd.f32 %v493, %v604
    %v606 = vpop.f32.mrf.mxu0
    %607 = vdwg.mxu0
    %s608 = scalar_lea.vmem [#allocation5], 128
    %v609 = vld [vmem:[%s608] sm:$0xff]
    %v610 = vld [vmem:[%s608 + $0x8] sm:$0xff]
    %v611 = vld [vmem:[%s608 + $0x10] sm:$0xff]
    %v612 = vld [vmem:[%s608 + $0x18] sm:$0xff]
    %v613 = vld [vmem:[%s608 + $0x20] sm:$0xff]
    %v614 = vld [vmem:[%s608 + $0x28] sm:$0xff]
    %v615 = vld [vmem:[%s608 + $0x30] sm:$0xff]
    %v616 = vld [vmem:[%s608 + $0x38] sm:$0xff]
    %vm617 = vcmask 1043456
    %v618 = vrot.slane %v333, 4
    %v619 = vrot.slane %v334, 4
    %v620 = vsel %vm617, %v618, %v619
    %v621 = vrot.slane %v335, 4
    %v622 = vsel %vm617, %v619, %v621
    %v623 = vrot.slane %v336, 4
    %v624 = vsel %vm617, %v621, %v623
    %v625 = vrot.slane %v337, 4
    %v626 = vsel %vm617, %v623, %v625
    %v627 = vrot.slane %v338, 4
    %v628 = vsel %vm617, %v625, %v627
    %v629 = vrot.slane %v339, 4
    %v630 = vsel %vm617, %v627, %v629
    %v631 = vrot.slane %v340, 4
    %v632 = vsel %vm617, %v629, %v631
    %v633 = vsel %vm383, %v620, 0
    %v635 = vsel %vm383, %v622, 0
    %v637 = vsel %vm383, %v624, 0
    %v639 = vsel %vm383, %v626, 0
    %v641 = vsel %vm383, %v628, 0
    %v643 = vsel %vm383, %v630, 0
    %v645 = vsel %vm383, %v632, 0
    %647 = vmatprep.subr.mxu0 0.0
    %648 = vmatpush1.msra.mxu0 0.0
    %649 = vmatprep.subr.mxu0 0.0
    %650 = vmatpush1.msra.mxu0 0.0
    %651 = vmatprep.subr.mxu0 0.0
    %652 = vmatpush1.msra.mxu0 0.0
    %653 = vmatprep.subr.mxu0 0.0
    %654 = vmatpush1.msra.mxu0 0.0
    %655 = vmatprep.subr.mxu0 0.0
    %656 = vmatpush1.msra.mxu0 0.0
    %657 = vmatprep.subr.mxu0 0.0
    %658 = vmatpush1.msra.mxu0 0.0
    %659 = vmatprep.subr.mxu0 0.0
    %660 = vmatpush1.msra.mxu0 0.0
    %661 = vmatprep.subr.mxu0 0.0
    %662 = vmatpush1.msra.mxu0 0.0
    %663 = vmatprep.subr.mxu0 0.0
    %664 = vmatpush1.msra.mxu0 %v616
    %665 = vmatprep.subr.mxu0 0.0
    %666 = vmatpush1.msra.mxu0 %v615
    %667 = vmatprep.subr.mxu0 0.0
    %668 = vmatpush1.msra.mxu0 %v614
    %669 = vmatprep.subr.mxu0 0.0
    %670 = vmatpush1.msra.mxu0 %v613
    %671 = vmatprep.subr.mxu0 0.0
    %672 = vmatpush1.msra.mxu0 %v612
    %673 = vmatprep.subr.mxu0 0.0
    %674 = vmatpush1.msra.mxu0 %v611
    %675 = vmatprep.subr.mxu0 0.0
    %676 = vmatpush1.msra.mxu0 %v610
    %677 = vmatprep.subr.mxu0 0.0
    %678 = vmatpush1.msra.mxu0 %v609
    %679 = vmatprep.subr.mxu0 0.0
    %680 = vmatpush2.msra.mxu0 0.0
    %681 = vmatprep.subr.mxu0 0.0
    %682 = vmatpush2.msra.mxu0 0.0
    %683 = vmatprep.subr.mxu0 0.0
    %684 = vmatpush2.msra.mxu0 0.0
    %685 = vmatprep.subr.mxu0 0.0
    %686 = vmatpush2.msra.mxu0 0.0
    %687 = vmatprep.subr.mxu0 0.0
    %688 = vmatpush2.msra.mxu0 0.0
    %689 = vmatprep.subr.mxu0 0.0
    %690 = vmatpush2.msra.mxu0 0.0
    %691 = vmatprep.subr.mxu0 0.0
    %692 = vmatpush2.msra.mxu0 0.0
    %693 = vmatprep.subr.mxu0 0.0
    %694 = vmatpush2.msra.mxu0 0.0
    %695 = vmatprep.subr.mxu0 0.0
    %696 = vmatpush2.msra.mxu0 0.0
    %697 = vmatprep.subr.mxu0 0.0
    %698 = vmatpush2.msra.mxu0 0.0
    %699 = vmatprep.subr.mxu0 0.0
    %700 = vmatpush2.msra.mxu0 0.0
    %701 = vmatprep.subr.mxu0 0.0
    %702 = vmatpush2.msra.mxu0 0.0
    %703 = vmatprep.subr.mxu0 0.0
    %704 = vmatpush2.msra.mxu0 0.0
    %705 = vmatprep.subr.mxu0 0.0
    %706 = vmatpush2.msra.mxu0 0.0
    %707 = vmatprep.subr.mxu0 0.0
    %708 = vmatpush2.msra.mxu0 0.0
    %709 = vmatprep.subr.mxu0 0.0
    %710 = vmatpush2.msra.mxu0 0.0
    %711 = vmatprep.mubr.f32.mxu0 0.0
    %712 = vmatmul.mubr.f32.gmra.mxu0 %v633
    %v713 = vpop.f32.mrf.mxu0
    %v714 = vadd.f32 0.0, %v713
    %v715 = vpop.f32.mrf.mxu0
    %716 = vmatprep.mubr.f32.mxu0 0.0
    %717 = vmatmul.mubr.f32.gmra.mxu0 %v635
    %v718 = vpop.f32.mrf.mxu0
    %v719 = vadd.f32 0.0, %v718
    %v720 = vpop.f32.mrf.mxu0
    %721 = vmatprep.mubr.f32.mxu0 0.0
    %722 = vmatmul.mubr.f32.gmra.mxu0 %v637
    %v723 = vpop.f32.mrf.mxu0
    %v724 = vadd.f32 0.0, %v723
    %v725 = vpop.f32.mrf.mxu0
    %726 = vmatprep.mubr.f32.mxu0 0.0
    %727 = vmatmul.mubr.f32.gmra.mxu0 %v639
    %v728 = vpop.f32.mrf.mxu0
    %v729 = vpop.f32.mrf.mxu0
    %730 = vmatprep.mubr.f32.mxu0 0.0
    %731 = vmatmul.mubr.f32.gmra.mxu0 %v641
    %v732 = vpop.f32.mrf.mxu0
    %v733 = vpop.f32.mrf.mxu0
    %734 = vmatprep.mubr.f32.mxu0 0.0
    %735 = vmatmul.mubr.f32.gmra.mxu0 %v643
    %v736 = vpop.f32.mrf.mxu0
    %v737 = vadd.f32 0.0, %v736
    %v738 = vpop.f32.mrf.mxu0
    %739 = vmatprep.mubr.f32.mxu0 0.0
    %740 = vmatmul.mubr.f32.gmra.mxu0 %v645
    %v741 = vpop.f32.mrf.mxu0
    %v742 = vadd.f32 0.0, %v741
    %v743 = vpop.f32.mrf.mxu0
    %744 = vdwg.mxu0
    %v745 = vadd.f32 %v577, %v714
    %v746 = vadd.f32 %v582, %v719
    %v747 = vadd.f32 %v587, %v724
    %v748 = vadd.f32 %v600, %v737
    %v749 = vadd.f32 %v605, %v742
    %s750 = scalar_lea.vmem [#allocation5], 192
    %v751 = vld [vmem:[%s750] sm:$0xff]
    %v752 = vld [vmem:[%s750 + $0x8] sm:$0xff]
    %v753 = vld [vmem:[%s750 + $0x10] sm:$0xff]
    %v754 = vld [vmem:[%s750 + $0x18] sm:$0xff]
    %v755 = vld [vmem:[%s750 + $0x20] sm:$0xff]
    %v756 = vld [vmem:[%s750 + $0x28] sm:$0xff]
    %v757 = vld [vmem:[%s750 + $0x30] sm:$0xff]
    %v758 = vld [vmem:[%s750 + $0x38] sm:$0xff]
    %vm759 = vcmask 1041408
    %v760 = vrot.slane %v333, 6
    %v761 = vrot.slane %v334, 6
    %v762 = vsel %vm759, %v760, %v761
    %v763 = vrot.slane %v335, 6
    %v764 = vsel %vm759, %v761, %v763
    %v765 = vrot.slane %v336, 6
    %v766 = vsel %vm759, %v763, %v765
    %v767 = vrot.slane %v337, 6
    %v768 = vsel %vm759, %v765, %v767
    %v769 = vrot.slane %v338, 6
    %v770 = vsel %vm759, %v767, %v769
    %v771 = vrot.slane %v339, 6
    %v772 = vsel %vm759, %v769, %v771
    %v773 = vrot.slane %v340, 6
    %v774 = vsel %vm759, %v771, %v773
    %v775 = vsel %vm383, %v762, 0
    %v777 = vsel %vm383, %v764, 0
    %v779 = vsel %vm383, %v766, 0
    %v781 = vsel %vm383, %v768, 0
    %v783 = vsel %vm383, %v770, 0
    %v785 = vsel %vm383, %v772, 0
    %v787 = vsel %vm383, %v774, 0
    %789 = vmatprep.subr.mxu0 0.0
    %790 = vmatpush1.msra.mxu0 0.0
    %791 = vmatprep.subr.mxu0 0.0
    %792 = vmatpush1.msra.mxu0 0.0
    %793 = vmatprep.subr.mxu0 0.0
    %794 = vmatpush1.msra.mxu0 0.0
    %795 = vmatprep.subr.mxu0 0.0
    %796 = vmatpush1.msra.mxu0 0.0
    %797 = vmatprep.subr.mxu0 0.0
    %798 = vmatpush1.msra.mxu0 0.0
    %799 = vmatprep.subr.mxu0 0.0
    %800 = vmatpush1.msra.mxu0 0.0
    %801 = vmatprep.subr.mxu0 0.0
    %802 = vmatpush1.msra.mxu0 0.0
    %803 = vmatprep.subr.mxu0 0.0
    %804 = vmatpush1.msra.mxu0 0.0
    %805 = vmatprep.subr.mxu0 0.0
    %806 = vmatpush1.msra.mxu0 %v758
    %807 = vmatprep.subr.mxu0 0.0
    %808 = vmatpush1.msra.mxu0 %v757
    %809 = vmatprep.subr.mxu0 0.0
    %810 = vmatpush1.msra.mxu0 %v756
    %811 = vmatprep.subr.mxu0 0.0
    %812 = vmatpush1.msra.mxu0 %v755
    %813 = vmatprep.subr.mxu0 0.0
    %814 = vmatpush1.msra.mxu0 %v754
    %815 = vmatprep.subr.mxu0 0.0
    %816 = vmatpush1.msra.mxu0 %v753
    %817 = vmatprep.subr.mxu0 0.0
    %818 = vmatpush1.msra.mxu0 %v752
    %819 = vmatprep.subr.mxu0 0.0
    %820 = vmatpush1.msra.mxu0 %v751
    %821 = vmatprep.subr.mxu0 0.0
    %822 = vmatpush2.msra.mxu0 0.0
    %823 = vmatprep.subr.mxu0 0.0
    %824 = vmatpush2.msra.mxu0 0.0
    %825 = vmatprep.subr.mxu0 0.0
    %826 = vmatpush2.msra.mxu0 0.0
    %827 = vmatprep.subr.mxu0 0.0
    %828 = vmatpush2.msra.mxu0 0.0
    %829 = vmatprep.subr.mxu0 0.0
    %830 = vmatpush2.msra.mxu0 0.0
    %831 = vmatprep.subr.mxu0 0.0
    %832 = vmatpush2.msra.mxu0 0.0
    %833 = vmatprep.subr.mxu0 0.0
    %834 = vmatpush2.msra.mxu0 0.0
    %835 = vmatprep.subr.mxu0 0.0
    %836 = vmatpush2.msra.mxu0 0.0
    %837 = vmatprep.subr.mxu0 0.0
    %838 = vmatpush2.msra.mxu0 0.0
    %839 = vmatprep.subr.mxu0 0.0
    %840 = vmatpush2.msra.mxu0 0.0
    %841 = vmatprep.subr.mxu0 0.0
    %842 = vmatpush2.msra.mxu0 0.0
    %843 = vmatprep.subr.mxu0 0.0
    %844 = vmatpush2.msra.mxu0 0.0
    %845 = vmatprep.subr.mxu0 0.0
    %846 = vmatpush2.msra.mxu0 0.0
    %847 = vmatprep.subr.mxu0 0.0
    %848 = vmatpush2.msra.mxu0 0.0
    %849 = vmatprep.subr.mxu0 0.0
    %850 = vmatpush2.msra.mxu0 0.0
    %851 = vmatprep.subr.mxu0 0.0
    %852 = vmatpush2.msra.mxu0 0.0
    %853 = vmatprep.mubr.f32.mxu0 0.0
    %854 = vmatmul.mubr.f32.gmra.mxu0 %v775
    %v855 = vpop.f32.mrf.mxu0
    %v856 = vadd.f32 0.0, %v855
    %v857 = vpop.f32.mrf.mxu0
    %858 = vmatprep.mubr.f32.mxu0 0.0
    %859 = vmatmul.mubr.f32.gmra.mxu0 %v777
    %v860 = vpop.f32.mrf.mxu0
    %v861 = vadd.f32 0.0, %v860
    %v862 = vpop.f32.mrf.mxu0
    %863 = vmatprep.mubr.f32.mxu0 0.0
    %864 = vmatmul.mubr.f32.gmra.mxu0 %v779
    %v865 = vpop.f32.mrf.mxu0
    %v866 = vadd.f32 0.0, %v865
    %v867 = vpop.f32.mrf.mxu0
    %868 = vmatprep.mubr.f32.mxu0 0.0
    %869 = vmatmul.mubr.f32.gmra.mxu0 %v781
    %v870 = vpop.f32.mrf.mxu0
    %v871 = vpop.f32.mrf.mxu0
    %872 = vmatprep.mubr.f32.mxu0 0.0
    %873 = vmatmul.mubr.f32.gmra.mxu0 %v783
    %v874 = vpop.f32.mrf.mxu0
    %v875 = vpop.f32.mrf.mxu0
    %876 = vmatprep.mubr.f32.mxu0 0.0
    %877 = vmatmul.mubr.f32.gmra.mxu0 %v785
    %v878 = vpop.f32.mrf.mxu0
    %v879 = vadd.f32 0.0, %v878
    %v880 = vpop.f32.mrf.mxu0
    %881 = vmatprep.mubr.f32.mxu0 0.0
    %882 = vmatmul.mubr.f32.gmra.mxu0 %v787
    %v883 = vpop.f32.mrf.mxu0
    %v884 = vadd.f32 0.0, %v883
    %v885 = vpop.f32.mrf.mxu0
    %886 = vdwg.mxu0
    %v887 = vadd.f32 %v745, %v856
    %v888 = vadd.f32 %v746, %v861
    %v889 = vadd.f32 %v747, %v866
    %v890 = vadd.f32 %v748, %v879
    %v891 = vadd.f32 %v749, %v884
    %s892 = scalar_lea.vmem [#allocation5], 256
    %v893 = vld [vmem:[%s892] sm:$0xff]
    %v894 = vld [vmem:[%s892 + $0x8] sm:$0xff]
    %v895 = vld [vmem:[%s892 + $0x10] sm:$0xff]
    %v896 = vld [vmem:[%s892 + $0x18] sm:$0xff]
    %v897 = vld [vmem:[%s892 + $0x20] sm:$0xff]
    %v898 = vld [vmem:[%s892 + $0x28] sm:$0xff]
    %v899 = vld [vmem:[%s892 + $0x30] sm:$0xff]
    %v900 = vld [vmem:[%s892 + $0x38] sm:$0xff]
    %v901 = vsel %vm383, %v340, 0
    %903 = vmatprep.subr.mxu0 0.0
    %904 = vmatpush1.msra.mxu0 0.0
    %905 = vmatprep.subr.mxu0 0.0
    %906 = vmatpush1.msra.mxu0 0.0
    %907 = vmatprep.subr.mxu0 0.0
    %908 = vmatpush1.msra.mxu0 0.0
    %909 = vmatprep.subr.mxu0 0.0
    %910 = vmatpush1.msra.mxu0 0.0
    %911 = vmatprep.subr.mxu0 0.0
    %912 = vmatpush1.msra.mxu0 0.0
    %913 = vmatprep.subr.mxu0 0.0
    %914 = vmatpush1.msra.mxu0 0.0
    %915 = vmatprep.subr.mxu0 0.0
    %916 = vmatpush1.msra.mxu0 0.0
    %917 = vmatprep.subr.mxu0 0.0
    %918 = vmatpush1.msra.mxu0 0.0
    %919 = vmatprep.subr.mxu0 0.0
    %920 = vmatpush1.msra.mxu0 %v900
    %921 = vmatprep.subr.mxu0 0.0
    %922 = vmatpush1.msra.mxu0 %v899
    %923 = vmatprep.subr.mxu0 0.0
    %924 = vmatpush1.msra.mxu0 %v898
    %925 = vmatprep.subr.mxu0 0.0
    %926 = vmatpush1.msra.mxu0 %v897
    %927 = vmatprep.subr.mxu0 0.0
    %928 = vmatpush1.msra.mxu0 %v896
    %929 = vmatprep.subr.mxu0 0.0
    %930 = vmatpush1.msra.mxu0 %v895
    %931 = vmatprep.subr.mxu0 0.0
    %932 = vmatpush1.msra.mxu0 %v894
    %933 = vmatprep.subr.mxu0 0.0
    %934 = vmatpush1.msra.mxu0 %v893
    %935 = vmatprep.subr.mxu0 0.0
    %936 = vmatpush2.msra.mxu0 0.0
    %937 = vmatprep.subr.mxu0 0.0
    %938 = vmatpush2.msra.mxu0 0.0
    %939 = vmatprep.subr.mxu0 0.0
    %940 = vmatpush2.msra.mxu0 0.0
    %941 = vmatprep.subr.mxu0 0.0
    %942 = vmatpush2.msra.mxu0 0.0
    %943 = vmatprep.subr.mxu0 0.0
    %944 = vmatpush2.msra.mxu0 0.0
    %945 = vmatprep.subr.mxu0 0.0
    %946 = vmatpush2.msra.mxu0 0.0
    %947 = vmatprep.subr.mxu0 0.0
    %948 = vmatpush2.msra.mxu0 0.0
    %949 = vmatprep.subr.mxu0 0.0
    %950 = vmatpush2.msra.mxu0 0.0
    %951 = vmatprep.subr.mxu0 0.0
    %952 = vmatpush2.msra.mxu0 0.0
    %953 = vmatprep.subr.mxu0 0.0
    %954 = vmatpush2.msra.mxu0 0.0
    %955 = vmatprep.subr.mxu0 0.0
    %956 = vmatpush2.msra.mxu0 0.0
    %957 = vmatprep.subr.mxu0 0.0
    %958 = vmatpush2.msra.mxu0 0.0
    %959 = vmatprep.subr.mxu0 0.0
    %960 = vmatpush2.msra.mxu0 0.0
    %961 = vmatprep.subr.mxu0 0.0
    %962 = vmatpush2.msra.mxu0 0.0
    %963 = vmatprep.subr.mxu0 0.0
    %964 = vmatpush2.msra.mxu0 0.0
    %965 = vmatprep.subr.mxu0 0.0
    %966 = vmatpush2.msra.mxu0 0.0
    %967 = vmatprep.mubr.f32.mxu0 0.0
    %968 = vmatmul.mubr.f32.gmra.mxu0 %v498
    %v969 = vpop.f32.mrf.mxu0
    %v970 = vadd.f32 0.0, %v969
    %v971 = vpop.f32.mrf.mxu0
    %972 = vmatprep.mubr.f32.mxu0 0.0
    %973 = vmatmul.mubr.f32.gmra.mxu0 %v500
    %v974 = vpop.f32.mrf.mxu0
    %v975 = vadd.f32 0.0, %v974
    %v976 = vpop.f32.mrf.mxu0
    %977 = vmatprep.mubr.f32.mxu0 0.0
    %978 = vmatmul.mubr.f32.gmra.mxu0 %v502
    %v979 = vpop.f32.mrf.mxu0
    %v980 = vadd.f32 0.0, %v979
    %v981 = vpop.f32.mrf.mxu0
    %982 = vmatprep.mubr.f32.mxu0 0.0
    %983 = vmatmul.mubr.f32.gmra.mxu0 %v504
    %v984 = vpop.f32.mrf.mxu0
    %v985 = vpop.f32.mrf.mxu0
    %986 = vmatprep.mubr.f32.mxu0 0.0
    %987 = vmatmul.mubr.f32.gmra.mxu0 %v506
    %v988 = vpop.f32.mrf.mxu0
    %v989 = vpop.f32.mrf.mxu0
    %990 = vmatprep.mubr.f32.mxu0 0.0
    %991 = vmatmul.mubr.f32.gmra.mxu0 %v508
    %v992 = vpop.f32.mrf.mxu0
    %v993 = vadd.f32 0.0, %v992
    %v994 = vpop.f32.mrf.mxu0
    %995 = vmatprep.mubr.f32.mxu0 0.0
    %996 = vmatmul.mubr.f32.gmra.mxu0 %v901
    %v997 = vpop.f32.mrf.mxu0
    %v998 = vadd.f32 0.0, %v997
    %v999 = vpop.f32.mrf.mxu0
    %1000 = vdwg.mxu0
    %v1001 = vadd.f32 %v887, %v970
    %v1002 = vadd.f32 %v888, %v975
    %v1003 = vadd.f32 %v889, %v980
    %v1004 = vadd.f32 %v890, %v993
    %v1005 = vadd.f32 %v891, %v998
    %s1006 = scalar_lea.vmem [#allocation5], 320
    %v1007 = vld [vmem:[%s1006] sm:$0xff]
    %v1008 = vld [vmem:[%s1006 + $0x8] sm:$0xff]
    %v1009 = vld [vmem:[%s1006 + $0x10] sm:$0xff]
    %v1010 = vld [vmem:[%s1006 + $0x18] sm:$0xff]
    %v1011 = vld [vmem:[%s1006 + $0x20] sm:$0xff]
    %v1012 = vld [vmem:[%s1006 + $0x28] sm:$0xff]
    %v1013 = vld [vmem:[%s1006 + $0x30] sm:$0xff]
    %v1014 = vld [vmem:[%s1006 + $0x38] sm:$0xff]
    %v1016 = vrot.slane %v341, 2
    %v1017 = vsel %vm367, %v381, %v1016
    %v1018 = vsel %vm383, %v1017, 0
    %1020 = vmatprep.subr.mxu0 0.0
    %1021 = vmatpush1.msra.mxu0 0.0
    %1022 = vmatprep.subr.mxu0 0.0
    %1023 = vmatpush1.msra.mxu0 0.0
    %1024 = vmatprep.subr.mxu0 0.0
    %1025 = vmatpush1.msra.mxu0 0.0
    %1026 = vmatprep.subr.mxu0 0.0
    %1027 = vmatpush1.msra.mxu0 0.0
    %1028 = vmatprep.subr.mxu0 0.0
    %1029 = vmatpush1.msra.mxu0 0.0
    %1030 = vmatprep.subr.mxu0 0.0
    %1031 = vmatpush1.msra.mxu0 0.0
    %1032 = vmatprep.subr.mxu0 0.0
    %1033 = vmatpush1.msra.mxu0 0.0
    %1034 = vmatprep.subr.mxu0 0.0
    %1035 = vmatpush1.msra.mxu0 0.0
    %1036 = vmatprep.subr.mxu0 0.0
    %1037 = vmatpush1.msra.mxu0 %v1014
    %1038 = vmatprep.subr.mxu0 0.0
    %1039 = vmatpush1.msra.mxu0 %v1013
    %1040 = vmatprep.subr.mxu0 0.0
    %1041 = vmatpush1.msra.mxu0 %v1012
    %1042 = vmatprep.subr.mxu0 0.0
    %1043 = vmatpush1.msra.mxu0 %v1011
    %1044 = vmatprep.subr.mxu0 0.0
    %1045 = vmatpush1.msra.mxu0 %v1010
    %1046 = vmatprep.subr.mxu0 0.0
    %1047 = vmatpush1.msra.mxu0 %v1009
    %1048 = vmatprep.subr.mxu0 0.0
    %1049 = vmatpush1.msra.mxu0 %v1008
    %1050 = vmatprep.subr.mxu0 0.0
    %1051 = vmatpush1.msra.mxu0 %v1007
    %1052 = vmatprep.subr.mxu0 0.0
    %1053 = vmatpush2.msra.mxu0 0.0
    %1054 = vmatprep.subr.mxu0 0.0
    %1055 = vmatpush2.msra.mxu0 0.0
    %1056 = vmatprep.subr.mxu0 0.0
    %1057 = vmatpush2.msra.mxu0 0.0
    %1058 = vmatprep.subr.mxu0 0.0
    %1059 = vmatpush2.msra.mxu0 0.0
    %1060 = vmatprep.subr.mxu0 0.0
    %1061 = vmatpush2.msra.mxu0 0.0
    %1062 = vmatprep.subr.mxu0 0.0
    %1063 = vmatpush2.msra.mxu0 0.0
    %1064 = vmatprep.subr.mxu0 0.0
    %1065 = vmatpush2.msra.mxu0 0.0
    %1066 = vmatprep.subr.mxu0 0.0
    %1067 = vmatpush2.msra.mxu0 0.0
    %1068 = vmatprep.subr.mxu0 0.0
    %1069 = vmatpush2.msra.mxu0 0.0
    %1070 = vmatprep.subr.mxu0 0.0
    %1071 = vmatpush2.msra.mxu0 0.0
    %1072 = vmatprep.subr.mxu0 0.0
    %1073 = vmatpush2.msra.mxu0 0.0
    %1074 = vmatprep.subr.mxu0 0.0
    %1075 = vmatpush2.msra.mxu0 0.0
    %1076 = vmatprep.subr.mxu0 0.0
    %1077 = vmatpush2.msra.mxu0 0.0
    %1078 = vmatprep.subr.mxu0 0.0
    %1079 = vmatpush2.msra.mxu0 0.0
    %1080 = vmatprep.subr.mxu0 0.0
    %1081 = vmatpush2.msra.mxu0 0.0
    %1082 = vmatprep.subr.mxu0 0.0
    %1083 = vmatpush2.msra.mxu0 0.0
    %1084 = vmatprep.mubr.f32.mxu0 0.0
    %1085 = vmatmul.mubr.f32.gmra.mxu0 %v386
    %v1086 = vpop.f32.mrf.mxu0
    %v1087 = vadd.f32 0.0, %v1086
    %v1088 = vpop.f32.mrf.mxu0
    %1089 = vmatprep.mubr.f32.mxu0 0.0
    %1090 = vmatmul.mubr.f32.gmra.mxu0 %v388
    %v1091 = vpop.f32.mrf.mxu0
    %v1092 = vadd.f32 0.0, %v1091
    %v1093 = vpop.f32.mrf.mxu0
    %1094 = vmatprep.mubr.f32.mxu0 0.0
    %1095 = vmatmul.mubr.f32.gmra.mxu0 %v390
    %v1096 = vpop.f32.mrf.mxu0
    %v1097 = vadd.f32 0.0, %v1096
    %v1098 = vpop.f32.mrf.mxu0
    %1099 = vmatprep.mubr.f32.mxu0 0.0
    %1100 = vmatmul.mubr.f32.gmra.mxu0 %v392
    %v1101 = vpop.f32.mrf.mxu0
    %v1102 = vpop.f32.mrf.mxu0
    %1103 = vmatprep.mubr.f32.mxu0 0.0
    %1104 = vmatmul.mubr.f32.gmra.mxu0 %v394
    %v1105 = vpop.f32.mrf.mxu0
    %v1106 = vpop.f32.mrf.mxu0
    %1107 = vmatprep.mubr.f32.mxu0 0.0
    %1108 = vmatmul.mubr.f32.gmra.mxu0 %v396
    %v1109 = vpop.f32.mrf.mxu0
    %v1110 = vadd.f32 0.0, %v1109
    %v1111 = vpop.f32.mrf.mxu0
    %1112 = vmatprep.mubr.f32.mxu0 0.0
    %1113 = vmatmul.mubr.f32.gmra.mxu0 %v1018
    %v1114 = vpop.f32.mrf.mxu0
    %v1115 = vadd.f32 0.0, %v1114
    %v1116 = vpop.f32.mrf.mxu0
    %1117 = vdwg.mxu0
    %v1118 = vadd.f32 %v1001, %v1087
    %v1119 = vadd.f32 %v1002, %v1092
    %v1120 = vadd.f32 %v1003, %v1097
    %v1121 = vadd.f32 %v1004, %v1110
    %v1122 = vadd.f32 %v1005, %v1115
    %s1123 = scalar_lea.vmem [#allocation5], 384
    %v1124 = vld [vmem:[%s1123] sm:$0xff]
    %v1125 = vld [vmem:[%s1123 + $0x8] sm:$0xff]
    %v1126 = vld [vmem:[%s1123 + $0x10] sm:$0xff]
    %v1127 = vld [vmem:[%s1123 + $0x18] sm:$0xff]
    %v1128 = vld [vmem:[%s1123 + $0x20] sm:$0xff]
    %v1129 = vld [vmem:[%s1123 + $0x28] sm:$0xff]
    %v1130 = vld [vmem:[%s1123 + $0x30] sm:$0xff]
    %v1131 = vld [vmem:[%s1123 + $0x38] sm:$0xff]
    %v1132 = vrot.slane %v341, 4
    %v1133 = vsel %vm617, %v631, %v1132
    %v1134 = vsel %vm383, %v1133, 0
    %1136 = vmatprep.subr.mxu0 0.0
    %1137 = vmatpush1.msra.mxu0 0.0
    %1138 = vmatprep.subr.mxu0 0.0
    %1139 = vmatpush1.msra.mxu0 0.0
    %1140 = vmatprep.subr.mxu0 0.0
    %1141 = vmatpush1.msra.mxu0 0.0
    %1142 = vmatprep.subr.mxu0 0.0
    %1143 = vmatpush1.msra.mxu0 0.0
    %1144 = vmatprep.subr.mxu0 0.0
    %1145 = vmatpush1.msra.mxu0 0.0
    %1146 = vmatprep.subr.mxu0 0.0
    %1147 = vmatpush1.msra.mxu0 0.0
    %1148 = vmatprep.subr.mxu0 0.0
    %1149 = vmatpush1.msra.mxu0 0.0
    %1150 = vmatprep.subr.mxu0 0.0
    %1151 = vmatpush1.msra.mxu0 0.0
    %1152 = vmatprep.subr.mxu0 0.0
    %1153 = vmatpush1.msra.mxu0 %v1131
    %1154 = vmatprep.subr.mxu0 0.0
    %1155 = vmatpush1.msra.mxu0 %v1130
    %1156 = vmatprep.subr.mxu0 0.0
    %1157 = vmatpush1.msra.mxu0 %v1129
    %1158 = vmatprep.subr.mxu0 0.0
    %1159 = vmatpush1.msra.mxu0 %v1128
    %1160 = vmatprep.subr.mxu0 0.0
    %1161 = vmatpush1.msra.mxu0 %v1127
    %1162 = vmatprep.subr.mxu0 0.0
    %1163 = vmatpush1.msra.mxu0 %v1126
    %1164 = vmatprep.subr.mxu0 0.0
    %1165 = vmatpush1.msra.mxu0 %v1125
    %1166 = vmatprep.subr.mxu0 0.0
    %1167 = vmatpush1.msra.mxu0 %v1124
    %1168 = vmatprep.subr.mxu0 0.0
    %1169 = vmatpush2.msra.mxu0 0.0
    %1170 = vmatprep.subr.mxu0 0.0
    %1171 = vmatpush2.msra.mxu0 0.0
    %1172 = vmatprep.subr.mxu0 0.0
    %1173 = vmatpush2.msra.mxu0 0.0
    %1174 = vmatprep.subr.mxu0 0.0
    %1175 = vmatpush2.msra.mxu0 0.0
    %1176 = vmatprep.subr.mxu0 0.0
    %1177 = vmatpush2.msra.mxu0 0.0
    %1178 = vmatprep.subr.mxu0 0.0
    %1179 = vmatpush2.msra.mxu0 0.0
    %1180 = vmatprep.subr.mxu0 0.0
    %1181 = vmatpush2.msra.mxu0 0.0
    %1182 = vmatprep.subr.mxu0 0.0
    %1183 = vmatpush2.msra.mxu0 0.0
    %1184 = vmatprep.subr.mxu0 0.0
    %1185 = vmatpush2.msra.mxu0 0.0
    %1186 = vmatprep.subr.mxu0 0.0
    %1187 = vmatpush2.msra.mxu0 0.0
    %1188 = vmatprep.subr.mxu0 0.0
    %1189 = vmatpush2.msra.mxu0 0.0
    %1190 = vmatprep.subr.mxu0 0.0
    %1191 = vmatpush2.msra.mxu0 0.0
    %1192 = vmatprep.subr.mxu0 0.0
    %1193 = vmatpush2.msra.mxu0 0.0
    %1194 = vmatprep.subr.mxu0 0.0
    %1195 = vmatpush2.msra.mxu0 0.0
    %1196 = vmatprep.subr.mxu0 0.0
    %1197 = vmatpush2.msra.mxu0 0.0
    %1198 = vmatprep.subr.mxu0 0.0
    %1199 = vmatpush2.msra.mxu0 0.0
    %1200 = vmatprep.mubr.f32.mxu0 0.0
    %1201 = vmatmul.mubr.f32.gmra.mxu0 %v635
    %v1202 = vpop.f32.mrf.mxu0
    %v1203 = vadd.f32 0.0, %v1202
    %v1204 = vpop.f32.mrf.mxu0
    %1205 = vmatprep.mubr.f32.mxu0 0.0
    %1206 = vmatmul.mubr.f32.gmra.mxu0 %v637
    %v1207 = vpop.f32.mrf.mxu0
    %v1208 = vadd.f32 0.0, %v1207
    %v1209 = vpop.f32.mrf.mxu0
    %1210 = vmatprep.mubr.f32.mxu0 0.0
    %1211 = vmatmul.mubr.f32.gmra.mxu0 %v639
    %v1212 = vpop.f32.mrf.mxu0
    %v1213 = vadd.f32 0.0, %v1212
    %v1214 = vpop.f32.mrf.mxu0
    %1215 = vmatprep.mubr.f32.mxu0 0.0
    %1216 = vmatmul.mubr.f32.gmra.mxu0 %v641
    %v1217 = vpop.f32.mrf.mxu0
    %v1218 = vpop.f32.mrf.mxu0
    %1219 = vmatprep.mubr.f32.mxu0 0.0
    %1220 = vmatmul.mubr.f32.gmra.mxu0 %v643
    %v1221 = vpop.f32.mrf.mxu0
    %v1222 = vpop.f32.mrf.mxu0
    %1223 = vmatprep.mubr.f32.mxu0 0.0
    %1224 = vmatmul.mubr.f32.gmra.mxu0 %v645
    %v1225 = vpop.f32.mrf.mxu0
    %v1226 = vadd.f32 0.0, %v1225
    %v1227 = vpop.f32.mrf.mxu0
    %1228 = vmatprep.mubr.f32.mxu0 0.0
    %1229 = vmatmul.mubr.f32.gmra.mxu0 %v1134
    %v1230 = vpop.f32.mrf.mxu0
    %v1231 = vadd.f32 0.0, %v1230
    %v1232 = vpop.f32.mrf.mxu0
    %1233 = vdwg.mxu0
    %v1234 = vadd.f32 %v1118, %v1203
    %v1235 = vadd.f32 %v1119, %v1208
    %v1236 = vadd.f32 %v1120, %v1213
    %v1237 = vadd.f32 %v1121, %v1226
    %v1238 = vadd.f32 %v1122, %v1231
    %s1239 = scalar_lea.vmem [#allocation5], 448
    %v1240 = vld [vmem:[%s1239] sm:$0xff]
    %v1241 = vld [vmem:[%s1239 + $0x8] sm:$0xff]
    %v1242 = vld [vmem:[%s1239 + $0x10] sm:$0xff]
    %v1243 = vld [vmem:[%s1239 + $0x18] sm:$0xff]
    %v1244 = vld [vmem:[%s1239 + $0x20] sm:$0xff]
    %v1245 = vld [vmem:[%s1239 + $0x28] sm:$0xff]
    %v1246 = vld [vmem:[%s1239 + $0x30] sm:$0xff]
    %v1247 = vld [vmem:[%s1239 + $0x38] sm:$0xff]
    %v1248 = vrot.slane %v341, 6
    %v1249 = vsel %vm759, %v773, %v1248
    %v1250 = vsel %vm383, %v1249, 0
    %1252 = vmatprep.subr.mxu0 0.0
    %1253 = vmatpush1.msra.mxu0 0.0
    %1254 = vmatprep.subr.mxu0 0.0
    %1255 = vmatpush1.msra.mxu0 0.0
    %1256 = vmatprep.subr.mxu0 0.0
    %1257 = vmatpush1.msra.mxu0 0.0
    %1258 = vmatprep.subr.mxu0 0.0
    %1259 = vmatpush1.msra.mxu0 0.0
    %1260 = vmatprep.subr.mxu0 0.0
    %1261 = vmatpush1.msra.mxu0 0.0
    %1262 = vmatprep.subr.mxu0 0.0
    %1263 = vmatpush1.msra.mxu0 0.0
    %1264 = vmatprep.subr.mxu0 0.0
    %1265 = vmatpush1.msra.mxu0 0.0
    %1266 = vmatprep.subr.mxu0 0.0
    %1267 = vmatpush1.msra.mxu0 0.0
    %1268 = vmatprep.subr.mxu0 0.0
    %1269 = vmatpush1.msra.mxu0 %v1247
    %1270 = vmatprep.subr.mxu0 0.0
    %1271 = vmatpush1.msra.mxu0 %v1246
    %1272 = vmatprep.subr.mxu0 0.0
    %1273 = vmatpush1.msra.mxu0 %v1245
    %1274 = vmatprep.subr.mxu0 0.0
    %1275 = vmatpush1.msra.mxu0 %v1244
    %1276 = vmatprep.subr.mxu0 0.0
    %1277 = vmatpush1.msra.mxu0 %v1243
    %1278 = vmatprep.subr.mxu0 0.0
    %1279 = vmatpush1.msra.mxu0 %v1242
    %1280 = vmatprep.subr.mxu0 0.0
    %1281 = vmatpush1.msra.mxu0 %v1241
    %1282 = vmatprep.subr.mxu0 0.0
    %1283 = vmatpush1.msra.mxu0 %v1240
    %1284 = vmatprep.subr.mxu0 0.0
    %1285 = vmatpush2.msra.mxu0 0.0
    %1286 = vmatprep.subr.mxu0 0.0
    %1287 = vmatpush2.msra.mxu0 0.0
    %1288 = vmatprep.subr.mxu0 0.0
    %1289 = vmatpush2.msra.mxu0 0.0
    %1290 = vmatprep.subr.mxu0 0.0
    %1291 = vmatpush2.msra.mxu0 0.0
    %1292 = vmatprep.subr.mxu0 0.0
    %1293 = vmatpush2.msra.mxu0 0.0
    %1294 = vmatprep.subr.mxu0 0.0
    %1295 = vmatpush2.msra.mxu0 0.0
    %1296 = vmatprep.subr.mxu0 0.0
    %1297 = vmatpush2.msra.mxu0 0.0
    %1298 = vmatprep.subr.mxu0 0.0
    %1299 = vmatpush2.msra.mxu0 0.0
    %1300 = vmatprep.subr.mxu0 0.0
    %1301 = vmatpush2.msra.mxu0 0.0
    %1302 = vmatprep.subr.mxu0 0.0
    %1303 = vmatpush2.msra.mxu0 0.0
    %1304 = vmatprep.subr.mxu0 0.0
    %1305 = vmatpush2.msra.mxu0 0.0
    %1306 = vmatprep.subr.mxu0 0.0
    %1307 = vmatpush2.msra.mxu0 0.0
    %1308 = vmatprep.subr.mxu0 0.0
    %1309 = vmatpush2.msra.mxu0 0.0
    %1310 = vmatprep.subr.mxu0 0.0
    %1311 = vmatpush2.msra.mxu0 0.0
    %1312 = vmatprep.subr.mxu0 0.0
    %1313 = vmatpush2.msra.mxu0 0.0
    %1314 = vmatprep.subr.mxu0 0.0
    %1315 = vmatpush2.msra.mxu0 0.0
    %1316 = vmatprep.mubr.f32.mxu0 0.0
    %1317 = vmatmul.mubr.f32.gmra.mxu0 %v777
    %v1318 = vpop.f32.mrf.mxu0
    %v1319 = vadd.f32 0.0, %v1318
    %v1320 = vpop.f32.mrf.mxu0
    %1321 = vmatprep.mubr.f32.mxu0 0.0
    %1322 = vmatmul.mubr.f32.gmra.mxu0 %v779
    %v1323 = vpop.f32.mrf.mxu0
    %v1324 = vadd.f32 0.0, %v1323
    %v1325 = vpop.f32.mrf.mxu0
    %1326 = vmatprep.mubr.f32.mxu0 0.0
    %1327 = vmatmul.mubr.f32.gmra.mxu0 %v781
    %v1328 = vpop.f32.mrf.mxu0
    %v1329 = vadd.f32 0.0, %v1328
    %v1330 = vpop.f32.mrf.mxu0
    %1331 = vmatprep.mubr.f32.mxu0 0.0
    %1332 = vmatmul.mubr.f32.gmra.mxu0 %v783
    %v1333 = vpop.f32.mrf.mxu0
    %v1334 = vpop.f32.mrf.mxu0
    %1335 = vmatprep.mubr.f32.mxu0 0.0
    %1336 = vmatmul.mubr.f32.gmra.mxu0 %v785
    %v1337 = vpop.f32.mrf.mxu0
    %v1338 = vpop.f32.mrf.mxu0
    %1339 = vmatprep.mubr.f32.mxu0 0.0
    %1340 = vmatmul.mubr.f32.gmra.mxu0 %v787
    %v1341 = vpop.f32.mrf.mxu0
    %v1342 = vadd.f32 0.0, %v1341
    %v1343 = vpop.f32.mrf.mxu0
    %1344 = vmatprep.mubr.f32.mxu0 0.0
    %1345 = vmatmul.mubr.f32.gmra.mxu0 %v1250
    %v1346 = vpop.f32.mrf.mxu0
    %v1347 = vadd.f32 0.0, %v1346
    %v1348 = vpop.f32.mrf.mxu0
    %1349 = vdwg.mxu0
    %v1350 = vadd.f32 %v1234, %v1319
    %v1351 = vadd.f32 %v1235, %v1324
    %v1352 = vadd.f32 %v1236, %v1329
    %v1353 = vadd.f32 %v1237, %v1342
    %v1354 = vadd.f32 %v1238, %v1347
    %v1355 = vld [vmem:[%s5] sm:$0x1]
    %v1357 = vlaneseq
    %v1358 = vshrl.u32 %v1357, 7
    %v1359 = vsub.s32 0, %v1358
    %v1360 = vrot.slane %v1355, %v1359
    %v1362 = vadd.f32 %v1350, %v1360
    %v1363 = vadd.f32 %v1351, %v1360
    %v1364 = vadd.f32 %v1352, %v1360
    %v1365 = vadd.f32 %v1353, %v1360
    %v1366 = vadd.f32 %v1354, %v1360
    %v1367 = vmax.f32 %v1362, 0.0
    %v1368 = vmax.f32 %v1363, 0.0
    %v1369 = vmax.f32 %v1364, 0.0
    %v1370 = vmax.f32 %v1365, 0.0
    %v1371 = vmax.f32 %v1366, 0.0
    %1377 = vrot.lane.b32.xlu0 %v1367, 64
    %v1378 = vpop.permute.xlu0 %1377
    %1379 = vrot.lane.b32.xlu0 %v1368, 64
    %v1380 = vpop.permute.xlu0 %1379
    %1381 = vrot.lane.b32.xlu0 %v1369, 64
    %v1382 = vpop.permute.xlu0 %1381
    %1383 = vrot.lane.b32.xlu0 %v1370, 64
    %v1384 = vpop.permute.xlu0 %1383
    %1385 = vrot.lane.b32.xlu0 %v1371, 64
    %v1386 = vpop.permute.xlu0 %1385
    %v1392 = vmax.f32 %v1367, %v1378
    %v1393 = vmax.f32 %v1368, %v1380
    %v1394 = vmax.f32 %v1369, %v1382
    %v1395 = vmax.f32 %v1370, %v1384
    %v1396 = vmax.f32 %v1371, %v1386
    %v1402 = vrot.slane %v1392, 2
    %v1403 = vrot.slane %v1393, 2
    %v1404 = vsel %vm367, %v1402, %v1403
    %v1405 = vrot.slane %v1394, 2
    %v1406 = vsel %vm367, %v1403, %v1405
    %v1407 = vrot.slane %v1395, 2
    %v1408 = vrot.slane %v1396, 2
    %v1409 = vsel %vm367, %v1407, %v1408
    %v1414 = vmax.f32 %v1392, %v1404
    %v1415 = vmax.f32 %v1393, %v1406
    %v1416 = vmax.f32 %v1395, %v1409
    %v1417 = vmax.f32 %v1396, %v1408
    %v1419 = vrot.slane %v1414, 4
    %1420 = vrot.lane.b32.xlu0 %v1419, 64
    %v1421 = vpop.permute.xlu0 %1420
    %v1424 = vrot.slane %v1415, 4
    %1425 = vrot.lane.b32.xlu0 %v1424, 64
    %v1426 = vpop.permute.xlu0 %1425
    %v1428 = vsel %vm383, %v1414, %v1421
    %v1429 = vsel %vm383, %v1415, %v1426
    %v1431 = vrot.slane %v1416, 4
    %1432 = vrot.lane.b32.xlu0 %v1431, 64
    %v1433 = vpop.permute.xlu0 %1432
    %v1436 = vrot.slane %v1417, 4
    %1437 = vrot.lane.b32.xlu0 %v1436, 64
    %v1438 = vpop.permute.xlu0 %1437
    %v1440 = vsel %vm383, %v1416, %v1433
    %v1441 = vsel %vm383, %v1417, %v1438
    %v1444 = vrot.slane %v1440, 7
    %v1445 = vrot.slane %v1441, 7
    %vm1448 = vcmask 1040384
    %v1449 = vsel %vm1448, %v1428, %v1444
    %v1450 = vsel %vm1448, %v1429, %v1445
    %v1451 = vld [vmem:[%s6] sm:$0xff]
    %v1452 = vld [vmem:[%s6 + $0x8] sm:$0xff]
    %v1453 = vld [vmem:[%s6 + $0x10] sm:$0xff]
    %v1454 = vld [vmem:[%s6 + $0x18] sm:$0xff]
    %v1455 = vld [vmem:[%s6 + $0x20] sm:$0xff]
    %v1456 = vld [vmem:[%s6 + $0x28] sm:$0xff]
    %v1457 = vld [vmem:[%s6 + $0x30] sm:$0xff]
    %v1458 = vld [vmem:[%s6 + $0x38] sm:$0xff]
    %v1459 = vld [vmem:[%s6 + $0x40] sm:$0xff]
    %v1460 = vld [vmem:[%s6 + $0x48] sm:$0xff]
    %v1461 = vld [vmem:[%s6 + $0x50] sm:$0xff]
    %v1462 = vld [vmem:[%s6 + $0x58] sm:$0xff]
    %v1463 = vld [vmem:[%s6 + $0x60] sm:$0xff]
    %v1464 = vld [vmem:[%s6 + $0x68] sm:$0xff]
    %v1465 = vld [vmem:[%s6 + $0x70] sm:$0xff]
    %v1466 = vld [vmem:[%s6 + $0x78] sm:$0xff]
    %v1467 = vld [vmem:[%s6 + $0x80] sm:$0xff]
    %v1468 = vld [vmem:[%s6 + $0x88] sm:$0xff]
    %v1469 = vld [vmem:[%s6 + $0x90] sm:$0xff]
    %v1470 = vld [vmem:[%s6 + $0x98] sm:$0xff]
    %v1471 = vld [vmem:[%s6 + $0xa0] sm:$0xff]
    %v1472 = vld [vmem:[%s6 + $0xa8] sm:$0xff]
    %v1473 = vld [vmem:[%s6 + $0xb0] sm:$0xff]
    %v1474 = vld [vmem:[%s6 + $0xb8] sm:$0xff]
    %v1475 = vld [vmem:[%s6 + $0xc0] sm:$0xff]
    %v1476 = vld [vmem:[%s6 + $0xc8] sm:$0xff]
    %v1477 = vld [vmem:[%s6 + $0xd0] sm:$0xff]
    %v1478 = vld [vmem:[%s6 + $0xd8] sm:$0xff]
    %v1479 = vld [vmem:[%s6 + $0xe0] sm:$0xff]
    %v1480 = vld [vmem:[%s6 + $0xe8] sm:$0xff]
    %v1481 = vld [vmem:[%s6 + $0xf0] sm:$0xff]
    %v1482 = vld [vmem:[%s6 + $0xf8] sm:$0xff]
    %v1483 = vld [vmem:[%s7] sm:$0x1]
    %v1485 = vlaneseq
    %v1486 = vshrl.u32 %v1485, 7
    %v1487 = vsub.s32 0, %v1486
    %v1488 = vrot.slane %v1483, %v1487
    %1490 = vmatprep.subr.mxu0 0.0
    %1491 = vmatpush1.msra.mxu0 %v1466
    %1492 = vmatprep.subr.mxu0 0.0
    %1493 = vmatpush1.msra.mxu0 %v1465
    %1494 = vmatprep.subr.mxu0 0.0
    %1495 = vmatpush1.msra.mxu0 %v1464
    %1496 = vmatprep.subr.mxu0 0.0
    %1497 = vmatpush1.msra.mxu0 %v1463
    %1498 = vmatprep.subr.mxu0 0.0
    %1499 = vmatpush1.msra.mxu0 %v1462
    %1500 = vmatprep.subr.mxu0 0.0
    %1501 = vmatpush1.msra.mxu0 %v1461
    %1502 = vmatprep.subr.mxu0 0.0
    %1503 = vmatpush1.msra.mxu0 %v1460
    %1504 = vmatprep.subr.mxu0 0.0
    %1505 = vmatpush1.msra.mxu0 %v1459
    %1506 = vmatprep.subr.mxu0 0.0
    %1507 = vmatpush1.msra.mxu0 %v1458
    %1508 = vmatprep.subr.mxu0 0.0
    %1509 = vmatpush1.msra.mxu0 %v1457
    %1510 = vmatprep.subr.mxu0 0.0
    %1511 = vmatpush1.msra.mxu0 %v1456
    %1512 = vmatprep.subr.mxu0 0.0
    %1513 = vmatpush1.msra.mxu0 %v1455
    %1514 = vmatprep.subr.mxu0 0.0
    %1515 = vmatpush1.msra.mxu0 %v1454
    %1516 = vmatprep.subr.mxu0 0.0
    %1517 = vmatpush1.msra.mxu0 %v1453
    %1518 = vmatprep.subr.mxu0 0.0
    %1519 = vmatpush1.msra.mxu0 %v1452
    %1520 = vmatprep.subr.mxu0 0.0
    %1521 = vmatpush1.msra.mxu0 %v1451
    %1522 = vmatprep.subr.mxu0 0.0
    %1523 = vmatpush2.msra.mxu0 %v1482
    %1524 = vmatprep.subr.mxu0 0.0
    %1525 = vmatpush2.msra.mxu0 %v1481
    %1526 = vmatprep.subr.mxu0 0.0
    %1527 = vmatpush2.msra.mxu0 %v1480
    %1528 = vmatprep.subr.mxu0 0.0
    %1529 = vmatpush2.msra.mxu0 %v1479
    %1530 = vmatprep.subr.mxu0 0.0
    %1531 = vmatpush2.msra.mxu0 %v1478
    %1532 = vmatprep.subr.mxu0 0.0
    %1533 = vmatpush2.msra.mxu0 %v1477
    %1534 = vmatprep.subr.mxu0 0.0
    %1535 = vmatpush2.msra.mxu0 %v1476
    %1536 = vmatprep.subr.mxu0 0.0
    %1537 = vmatpush2.msra.mxu0 %v1475
    %1538 = vmatprep.subr.mxu0 0.0
    %1539 = vmatpush2.msra.mxu0 %v1474
    %1540 = vmatprep.subr.mxu0 0.0
    %1541 = vmatpush2.msra.mxu0 %v1473
    %1542 = vmatprep.subr.mxu0 0.0
    %1543 = vmatpush2.msra.mxu0 %v1472
    %1544 = vmatprep.subr.mxu0 0.0
    %1545 = vmatpush2.msra.mxu0 %v1471
    %1546 = vmatprep.subr.mxu0 0.0
    %1547 = vmatpush2.msra.mxu0 %v1470
    %1548 = vmatprep.subr.mxu0 0.0
    %1549 = vmatpush2.msra.mxu0 %v1469
    %1550 = vmatprep.subr.mxu0 0.0
    %1551 = vmatpush2.msra.mxu0 %v1468
    %1552 = vmatprep.subr.mxu0 0.0
    %1553 = vmatpush2.msra.mxu0 %v1467
    %1554 = vmatprep.mubr.f32.mxu0 %v1450
    %1555 = vmatmul.mubr.f32.gmra.mxu0 %v1449
    %v1556 = vpop.f32.mrf.mxu0
    %v1557 = vadd.f32 %v1488, %v1556
    %v1558 = vpop.f32.mrf.mxu0
    %1559 = vdwg.mxu0
    %vm1560 = vcmask 9216
    %v1561 = vsel %vm1560, %v1557, -inf
    %1562 = vmax.xlane.f32.xlu0 %v1561
    %v1563 = vpop.xlane.xlu0 %1562
    %v1564 = vsub.f32 %v1557, %v1563
    %v1565 = vmul.f32 %v1564, 1.442695
    %v1566 = vpow.pop %v1565
    %v1567 = vsel %vm1560, %v1566, 0.0
    %1568 = vadd.xlane.f32.xlu0 %v1567
    %v1569 = vpop.xlane.xlu0 %1568
    %v1570 = vlog2.pop %v1569
    %v1571 = vmul.f32 %v1570, 0.6931472
    %v1572 = vsub.f32 %v1564, %v1571
    %1573 = vst.msk [vmem:[#allocation7] sm:$0x3] %vm1560, %v1572
    // Predicated region
    $region42: #{tpu_custom_call.1} parent=1 // pred_check
      _
    $region43: #{tpu_custom_call.1} parent=1 // pred_check_branch
      %1575 = sbr.rel (0) target = $region45
    $region44: #{tpu_custom_call.1} parent=1 // pred_region
      %s1577 = ssub.s32 32, 32
      %1578 = vsyncadd [#allocation4], %s1577
      %s1580 = sshll.u32 [#allocation7], 4
      %s1581 = int_to_ptr.vmem [resolvable:$true] %s1580
      %1583 = dma.vmem_to_hbm [thread:$0]  %s1581, 32, %s8, [#allocation4]
    $region45: #{tpu_custom_call.1} parent=1 // pred_fallthru
      _
    // Predicated region
    $region46: #{tpu_custom_call.1} parent=1 // pred_check
      _
    $region47: #{tpu_custom_call.1} parent=1 // pred_check_branch
      %1585 = sbr.rel (0) target = $region49
    $region48: #{tpu_custom_call.1} parent=1 // pred_region
      %1586 = dma.done [#allocation4], 32
    $region49: #{tpu_custom_call.1} parent=1 // pred_fallthru
      _
    %1587 = vsyncpa [#allocation3], 1
    %1588 = vsyncpa [#allocation6], 1
    %1589 = vsyncpa [#allocation4], 1

</llo_original>
